<compile_context>
chip_gen: v7x
topology: tpu7x:2x2x1
jax: 0.10.0
libtpu: 0.0.40
codegen_flags: <defaults>
</compile_context>

<pallas_src>
import jax
import jax.numpy as jnp
import numpy as np
from jax.experimental import pallas as pl
from jax.experimental.pallas import tpu as pltpu


# ---------------------------------------------------------------------------
# Fused forward kernel
# ---------------------------------------------------------------------------

def _shift_rows_down(v, k):
    """Value whose row r holds v[(r + k) % R].  Wrapped rows only ever feed garbage
    rows that are never read.  Static shift -> cheap XLU sublane rotation."""
    if k == 0:
        return v
    return pltpu.roll(v, v.shape[0] - k, axis=0)   # == jnp.roll(v, -k, axis=0)


def _lenet_kernel(x_ref,
                  wc1_ref, bc1_ref, wc2_ref, bc2_ref,
                  wf1_ref, bf1_ref, wf2_ref, bf2_ref, wf3_ref, bf3_ref,
                  out_ref):
    """Whole LeNet forward for a tile of TB images.

    Image row space: r = b*32 + y (b = image within tile).  Column spaces:
      x     : (TB*32,  96)  col = 32*ci + x        (channel-major planes)
      conv1 : (TB*32, 168)  col = 84*p + 6*x1 + c1 (p = x parity before pool)
      h1    : (TB*32,  84)  col = 6*x1 + c1        valid rows b*32 + 2*y1
      conv2 : (TB*32, 160)  col = 80*p + 16*x3 + c2
      h2    : (TB*32,  80)  col = 16*x3 + c2       valid rows b*32 + 4*y3
      fc    : (TB, 400/120/84/128)                 one row per image
    Rows not corresponding to a valid output location hold garbage that is never
    read (the price of a reshape-free, lane-dense conv pipeline).
    """
    tb = x_ref.shape[0]
    rows = tb * 32

    def mm(a, b):
        # Cast LHS to the stored weight dtype (bf16 or f32); accumulate in f32.
        return jnp.dot(a.astype(b.dtype), b, preferred_element_type=jnp.float32)

    # ---- assemble the channel-major image slab entirely in VMEM ------------
    x4 = x_ref[...]                                                 # (TB, 3, 32, 32)
    x = jnp.concatenate(
        [x4[:, ci, :, :].reshape(rows, 32) for ci in range(3)], axis=-1)  # (rows, 96)

    # ---- conv1 (5x5, 3->6) + bias + ReLU + 2x2 max-pool ---------------------
    acc = mm(x, wc1_ref[0])
    for ky in range(1, 5):
        acc = acc + mm(_shift_rows_down(x, ky), wc1_ref[ky])
    b1 = bc1_ref[...]
    m = jnp.maximum(jnp.maximum(acc[:, :84] + b1, 0.0),            # even x columns
                    jnp.maximum(acc[:, 84:] + b1, 0.0))            # odd  x columns
    h1 = jnp.maximum(m, _shift_rows_down(m, 1))                    # pool over y

    # ---- conv2 (5x5, 6->16) + bias + ReLU + 2x2 max-pool --------------------
    acc = mm(h1, wc2_ref[0])
    for ky in range(1, 5):
        acc = acc + mm(_shift_rows_down(h1, 2 * ky), wc2_ref[ky])  # h1 rows at stride 2
    b2 = bc2_ref[...]
    m = jnp.maximum(jnp.maximum(acc[:, :80] + b2, 0.0),
                    jnp.maximum(acc[:, 80:] + b2, 0.0))
    h2 = jnp.maximum(m, _shift_rows_down(m, 2))                    # valid rows b*32+4*y3

    # ---- compact to one row per image; torch CHW flatten folded into wf1 ----
    h2r = h2.reshape(tb, 32, 80)
    xf = jnp.concatenate([h2r[:, 4 * y3, :] for y3 in range(5)], axis=-1)   # (TB, 400)

    # ---- fc1 (400->120) + ReLU, fc2 (120->84) + ReLU, fc3 (84->10 pad 128) ---
    h = jnp.maximum(mm(xf, wf1_ref[...]) + bf1_ref[...], 0.0)
    h = jnp.maximum(mm(h, wf2_ref[...]) + bf2_ref[...], 0.0)
    out_ref[...] = (mm(h, wf3_ref[...]) + bf3_ref[...]).astype(out_ref.dtype)


# ---------------------------------------------------------------------------
# One-time weight re-layout (plain numpy/JAX, done once outside the hot path)
# ---------------------------------------------------------------------------

def _conv_band_weights(w, *, n_xout, n_xin, channel_major_in, compute_dtype):
    """Fold a 5x5 'valid' conv + the x half of the 2x2 max-pool into 5 band matrices.

    Returns (5, n_xin*cin, 2*n_xout*cout) with
      band[ky, row(ci, xin), (p*n_xout + xo)*cout + co] = w[co, ci, ky, kx]
    where xin = 2*xo + p + kx and
      row = ci*n_xin + xin   (channel-major input cols, used for conv1)
      row = xin*cin + ci     (x-major interleaved cols, used for conv2)
    p=0 / p=1 are the even / odd output x positions; the kernel max-pools the halves.
    """
    w = np.asarray(w, np.float32)
    cout, cin, K, _ = w.shape
    bands = np.zeros((K, n_xin * cin, 2 * n_xout * cout), np.float32)
    for ky in range(K):
        for kx in range(K):
            for p in (0, 1):
                for xo in range(n_xout):
                    xin = 2 * xo + p + kx
                    col0 = (p * n_xout + xo) * cout
                    for ci in range(cin):
                        row = ci * n_xin + xin if channel_major_in else xin * cin + ci
                        bands[ky, row, col0:col0 + cout] = w[:, ci, ky, kx]
    return jnp.asarray(bands, dtype=compute_dtype)


def prepare_kernel_params(params, compute_dtype=jnp.bfloat16):
    """Transform torch-layout parameters into the fused kernel's layout (call once).

    GEMM operands (weights) are stored in `compute_dtype` (bf16 by default for
    full-rate MXU and halved weight DMA); biases stay f32 (epilogue math is f32).
    """
    f32 = np.float32
    kp = {}
    # conv1: input cols 32*ci + x  ->  output cols 84*p + 6*x1 + c1
    kp["wc1"] = _conv_band_weights(params["conv1_w"], n_xout=14, n_xin=32,
                                   channel_major_in=True, compute_dtype=compute_dtype)
    kp["bc1"] = jnp.asarray(np.tile(np.asarray(params["conv1_b"], f32), 14).reshape(1, 84))
    # conv2: input cols 6*x1 + c1  ->  output cols 80*p + 16*x3 + c2
    kp["wc2"] = _conv_band_weights(params["conv2_w"], n_xout=5, n_xin=14,
                                   channel_major_in=False, compute_dtype=compute_dtype)
    kp["bc2"] = jnp.asarray(np.tile(np.asarray(params["conv2_b"], f32), 5).reshape(1, 80))

    # fc1: fold torch's view(-1, 16*5*5) index (c2*25 + y3*5 + x3) into row order
    # 80*y3 + 16*x3 + c2 to match the kernel's lane-concatenated (TB, 400) input.
    w4 = np.asarray(params["fc1_w"], f32).reshape(120, 16, 5, 5)    # (f, c2, y3, x3)
    wf1 = np.zeros((400, 120), f32)
    for y3 in range(5):
        for x3 in range(5):
            for c2 in range(16):
                wf1[80 * y3 + 16 * x3 + c2, :] = w4[:, c2, y3, x3]
    kp["wf1"] = jnp.asarray(wf1, dtype=compute_dtype)
    kp["bf1"] = jnp.asarray(np.asarray(params["fc1_b"], f32).reshape(1, 120))
    kp["wf2"] = jnp.asarray(np.asarray(params["fc2_w"], f32).T, dtype=compute_dtype)
    kp["bf2"] = jnp.asarray(np.asarray(params["fc2_b"], f32).reshape(1, 84))
    # fc3 padded to 128 output lanes -> the single HBM store is unmasked/lane-dense.
    kp["wf3"] = jnp.asarray(np.pad(np.asarray(params["fc3_w"], f32).T, ((0, 0), (0, 118))),
                            dtype=compute_dtype)                    # (84, 128)
    kp["bf3"] = jnp.asarray(np.pad(np.asarray(params["fc3_b"], f32), (0, 118)).reshape(1, 128))
    return kp


# ---------------------------------------------------------------------------
# Forward wrapper
# ---------------------------------------------------------------------------

def _pick_batch_tile(B):
    """Pick the batch-tile size TB.

    TB is always a multiple-of-8 divisor of B (so the (TB, 128) output block obeys
    the (8,128) rule) or B itself for small/awkward batches.  Prefer large tiles
    (up to 64 images -> rows 2048) to amortize per-grid-step overhead, but keep
    >=2 grid programs when possible so both v7x TensorCores get work.
    """
    divs = [d for d in range(64, 7, -8) if B % d == 0]
    if not divs:
        return B                    # tiny / odd batch: one tile == whole batch
    for d in divs:
        if B // d >= 2:
            return d
    return divs[0]                  # B itself is a single multiple-of-8 tile


def net_forward(x_nchw, kparams):
    """Forward pass.  x_nchw: (B, 3, 32, 32) float, torch NCHW layout."""
    B, C, H, W = x_nchw.shape
    assert (C, H, W) == (3, 32, 32), "LeNet head (16*5*5) requires 3x32x32 inputs"

    tb = _pick_batch_tile(B)
    assert B % tb == 0
    grid = (B // tb,)

    w_order = ("wc1", "bc1", "wc2", "bc2", "wf1", "bf1", "wf2", "bf2", "wf3", "bf3")
    w_args = [kparams[k] for k in w_order]

    def full_spec(shape):
        nd = len(shape)
        return pl.BlockSpec(shape, lambda i, _nd=nd: (0,) * _nd)

    out = pl.pallas_call(
        _lenet_kernel,
        out_shape=jax.ShapeDtypeStruct((B, 128), jnp.float32),
        grid=grid,
        in_specs=[pl.BlockSpec((tb, 3, 32, 32), lambda i: (i, 0, 0, 0))]
                 + [full_spec(a.shape) for a in w_args],
        out_specs=pl.BlockSpec((tb, 128), lambda i: (i, 0)),
        compiler_params=pltpu.CompilerParams(dimension_semantics=("parallel",)),
    )(x_nchw, *w_args)

    return out[:, :10]


# ---------------------------------------------------------------------------
# Init + pure-JAX reference (for verification)
# ---------------------------------------------------------------------------

def init_params(key):
    keys = jax.random.split(key, 10)

    def u(k, shape, fan_in):
        bound = 1.0 / float(fan_in) ** 0.5
        return jax.random.uniform(k, shape, jnp.float32, -bound, bound)

    return dict(
        conv1_w=u(keys[0], (6, 3, 5, 5), 3 * 25),
        conv1_b=u(keys[1], (6,), 3 * 25),
        conv2_w=u(keys[2], (16, 6, 5, 5), 6 * 25),
        conv2_b=u(keys[3], (16,), 6 * 25),
        fc1_w=u(keys[4], (120, 400), 400),
        fc1_b=u(keys[5], (120,), 400),
        fc2_w=u(keys[6], (84, 120), 120),
        fc2_b=u(keys[7], (84,), 120),
        fc3_w=u(keys[8], (10, 84), 84),
        fc3_b=u(keys[9], (10,), 84),
    )


def reference_forward(x_nchw, params):
    hp = jax.lax.Precision.HIGHEST
    x = jnp.transpose(x_nchw, (0, 2, 3, 1))

    def conv(v, w, b):
        out = jax.lax.conv_general_dilated(
            v, jnp.transpose(w, (2, 3, 1, 0)), (1, 1), "VALID",
            dimension_numbers=("NHWC", "HWIO", "NHWC"), precision=hp)
        return out + b

    def pool(v):
        Bn, Hh, Ww, Cc = v.shape
        return jnp.max(v.reshape(Bn, Hh // 2, 2, Ww // 2, 2, Cc), axis=(2, 4))

    h = pool(jax.nn.relu(conv(x, params["conv1_w"], params["conv1_b"])))
    h = pool(jax.nn.relu(conv(h, params["conv2_w"], params["conv2_b"])))
    flat = jnp.transpose(h, (0, 3, 1, 2)).reshape(x.shape[0], 400)
    h = jax.nn.relu(jnp.dot(flat, params["fc1_w"].T, precision=hp) + params["fc1_b"])
    h = jax.nn.relu(jnp.dot(h, params["fc2_w"].T, precision=hp) + params["fc2_b"])
    return jnp.dot(h, params["fc3_w"].T, precision=hp) + params["fc3_b"]


if __name__ == "__main__":
    key = jax.random.PRNGKey(0)
    k_x, k_p = jax.random.split(key)
    params = init_params(k_p)

    fwd = jax.jit(net_forward)
    ref_fn = jax.jit(reference_forward)

    # 1) f32 GEMM operands, tiny batch (exercises the TB == B single-tile path).
    x_small = jax.random.normal(k_x, (2, 3, 32, 32), jnp.float32)
    kp_f32 = prepare_kernel_params(params, compute_dtype=jnp.float32)
    out_f32 = jax.block_until_ready(fwd(x_small, kp_f32))
    assert out_f32.shape == (2, 10) and out_f32.dtype == jnp.float32
    ref_small = jax.block_until_ready(ref_fn(x_small, params))
    err_f32 = float(jnp.max(jnp.abs(out_f32 - ref_small)))
    assert err_f32 < 1e-2, f"f32 kernel/reference mismatch: max abs err = {err_f32}"

    # 2) bf16 GEMM operands (default), multi-tile batch (TB=8, 2 grid programs).
    x_big = jax.random.normal(k_x, (16, 3, 32, 32), jnp.float32)
    kp_bf16 = prepare_kernel_params(params)            # bf16 weights, f32 accumulation
    out_bf16 = jax.block_until_ready(fwd(x_big, kp_bf16))
    assert out_bf16.shape == (16, 10) and out_bf16.dtype == jnp.float32
    ref_big = jax.block_until_ready(ref_fn(x_big, params))
    err_bf16 = float(jnp.max(jnp.abs(out_bf16 - ref_big)))
    assert err_bf16 < 5e-2, f"bf16 kernel/reference mismatch: max abs err = {err_bf16}"

    print("KERNEL_OK")
</pallas_src>

<mosaic_0001>
module attributes {stable_mosaic.version = 11 : i64} {
  func.func @_lenet_kernel(%arg0: i32, %arg1: memref<2x3x32x32xf32, #tpu.memory_space<vmem>>, %arg2: memref<5x96x168xf32, #tpu.memory_space<vmem>>, %arg3: memref<1x84xf32, #tpu.memory_space<vmem>>, %arg4: memref<5x84x160xf32, #tpu.memory_space<vmem>>, %arg5: memref<1x80xf32, #tpu.memory_space<vmem>>, %arg6: memref<400x120xf32, #tpu.memory_space<vmem>>, %arg7: memref<1x120xf32, #tpu.memory_space<vmem>>, %arg8: memref<120x84xf32, #tpu.memory_space<vmem>>, %arg9: memref<1x84xf32, #tpu.memory_space<vmem>>, %arg10: memref<84x128xf32, #tpu.memory_space<vmem>>, %arg11: memref<1x128xf32, #tpu.memory_space<vmem>>, %arg12: memref<2x128xf32, #tpu.memory_space<vmem>>) attributes {dimension_semantics = [#tpu.dimension_semantics<parallel>], iteration_bounds = array<i64: 1>, scalar_prefetch = 0 : i64, scratch_operands = 0 : i64, tpu.core_type = #tpu.core_type<tc>, window_params = [{transform_indices = @transform_0, window_bounds = array<i64: 2, 3, 32, 32>}, {pipeline_mode = #tpu.pipeline_mode<synchronous>, transform_indices = @transform_1, window_bounds = array<i64: 5, 96, 168>}, {pipeline_mode = #tpu.pipeline_mode<synchronous>, transform_indices = @transform_2, window_bounds = array<i64: 1, 84>}, {pipeline_mode = #tpu.pipeline_mode<synchronous>, transform_indices = @transform_3, window_bounds = array<i64: 5, 84, 160>}, {pipeline_mode = #tpu.pipeline_mode<synchronous>, transform_indices = @transform_4, window_bounds = array<i64: 1, 80>}, {pipeline_mode = #tpu.pipeline_mode<synchronous>, transform_indices = @transform_5, window_bounds = array<i64: 400, 120>}, {pipeline_mode = #tpu.pipeline_mode<synchronous>, transform_indices = @transform_6, window_bounds = array<i64: 1, 120>}, {pipeline_mode = #tpu.pipeline_mode<synchronous>, transform_indices = @transform_7, window_bounds = array<i64: 120, 84>}, {pipeline_mode = #tpu.pipeline_mode<synchronous>, transform_indices = @transform_8, window_bounds = array<i64: 1, 84>}, {pipeline_mode = #tpu.pipeline_mode<synchronous>, transform_indices = @transform_9, window_bounds = array<i64: 84, 128>}, {pipeline_mode = #tpu.pipeline_mode<synchronous>, transform_indices = @transform_10, window_bounds = array<i64: 1, 128>}, {transform_indices = @transform_11, window_bounds = array<i64: 2, 128>}]} {
    %c0 = arith.constant 0 : index
    %c0_0 = arith.constant 0 : index
    %c0_1 = arith.constant 0 : index
    %c0_2 = arith.constant 0 : index
    %0 = vector.load %arg1[%c0, %c0_0, %c0_1, %c0_2] : memref<2x3x32x32xf32, #tpu.memory_space<vmem>>, vector<2x3x32x32xf32>
    %1 = vector.extract_strided_slice %0 {offsets = [0, 0, 0, 0], sizes = [2, 1, 32, 32], strides = [1, 1, 1, 1]} : vector<2x3x32x32xf32> to vector<2x1x32x32xf32>
    %2 = vector.shape_cast %1 : vector<2x1x32x32xf32> to vector<2x32x32xf32>
    %3 = vector.shape_cast %2 : vector<2x32x32xf32> to vector<64x32xf32>
    %4 = vector.extract_strided_slice %0 {offsets = [0, 1, 0, 0], sizes = [2, 1, 32, 32], strides = [1, 1, 1, 1]} : vector<2x3x32x32xf32> to vector<2x1x32x32xf32>
    %5 = vector.shape_cast %4 : vector<2x1x32x32xf32> to vector<2x32x32xf32>
    %6 = vector.shape_cast %5 : vector<2x32x32xf32> to vector<64x32xf32>
    %7 = vector.extract_strided_slice %0 {offsets = [0, 2, 0, 0], sizes = [2, 1, 32, 32], strides = [1, 1, 1, 1]} : vector<2x3x32x32xf32> to vector<2x1x32x32xf32>
    %8 = vector.shape_cast %7 : vector<2x1x32x32xf32> to vector<2x32x32xf32>
    %9 = vector.shape_cast %8 : vector<2x32x32xf32> to vector<64x32xf32>
    %10 = tpu.concatenate %3, %6, %9 in 1 : vector<64x32xf32>, vector<64x32xf32>, vector<64x32xf32> -> vector<64x96xf32>
    %c0_3 = arith.constant 0 : index
    %c0_4 = arith.constant 0 : index
    %c0_5 = arith.constant 0 : index
    %11 = vector.load %arg2[%c0_3, %c0_4, %c0_5] : memref<5x96x168xf32, #tpu.memory_space<vmem>>, vector<1x96x168xf32>
    %12 = vector.shape_cast %11 : vector<1x96x168xf32> to vector<96x168xf32>
    %cst = arith.constant dense<0.000000e+00> : vector<64x168xf32>
    %13 = tpu.matmul %10, %12, %cst {dimension_numbers = #tpu.dot_dimension_numbers<[1], [0], [0], [1], [0, 0, 1, 1], [], []>} : vector<64x96xf32>, vector<96x168xf32>, vector<64x168xf32> -> vector<64x168xf32>
    %c63_i32 = arith.constant 63 : i32
    %14 = tpu.dynamic_rotate %10 by %c63_i32 dim 0 : vector<64x96xf32>, i32 -> vector<64x96xf32>
    %c1 = arith.constant 1 : index
    %c0_6 = arith.constant 0 : index
    %c0_7 = arith.constant 0 : index
    %15 = vector.load %arg2[%c1, %c0_6, %c0_7] : memref<5x96x168xf32, #tpu.memory_space<vmem>>, vector<1x96x168xf32>
    %16 = vector.shape_cast %15 : vector<1x96x168xf32> to vector<96x168xf32>
    %cst_8 = arith.constant dense<0.000000e+00> : vector<64x168xf32>
    %17 = tpu.matmul %14, %16, %cst_8 {dimension_numbers = #tpu.dot_dimension_numbers<[1], [0], [0], [1], [0, 0, 1, 1], [], []>} : vector<64x96xf32>, vector<96x168xf32>, vector<64x168xf32> -> vector<64x168xf32>
    %18 = arith.addf %13, %17 : vector<64x168xf32>
    %c62_i32 = arith.constant 62 : i32
    %19 = tpu.dynamic_rotate %10 by %c62_i32 dim 0 : vector<64x96xf32>, i32 -> vector<64x96xf32>
    %c2 = arith.constant 2 : index
    %c0_9 = arith.constant 0 : index
    %c0_10 = arith.constant 0 : index
    %20 = vector.load %arg2[%c2, %c0_9, %c0_10] : memref<5x96x168xf32, #tpu.memory_space<vmem>>, vector<1x96x168xf32>
    %21 = vector.shape_cast %20 : vector<1x96x168xf32> to vector<96x168xf32>
    %cst_11 = arith.constant dense<0.000000e+00> : vector<64x168xf32>
    %22 = tpu.matmul %19, %21, %cst_11 {dimension_numbers = #tpu.dot_dimension_numbers<[1], [0], [0], [1], [0, 0, 1, 1], [], []>} : vector<64x96xf32>, vector<96x168xf32>, vector<64x168xf32> -> vector<64x168xf32>
    %23 = arith.addf %18, %22 : vector<64x168xf32>
    %c61_i32 = arith.constant 61 : i32
    %24 = tpu.dynamic_rotate %10 by %c61_i32 dim 0 : vector<64x96xf32>, i32 -> vector<64x96xf32>
    %c3 = arith.constant 3 : index
    %c0_12 = arith.constant 0 : index
    %c0_13 = arith.constant 0 : index
    %25 = vector.load %arg2[%c3, %c0_12, %c0_13] : memref<5x96x168xf32, #tpu.memory_space<vmem>>, vector<1x96x168xf32>
    %26 = vector.shape_cast %25 : vector<1x96x168xf32> to vector<96x168xf32>
    %cst_14 = arith.constant dense<0.000000e+00> : vector<64x168xf32>
    %27 = tpu.matmul %24, %26, %cst_14 {dimension_numbers = #tpu.dot_dimension_numbers<[1], [0], [0], [1], [0, 0, 1, 1], [], []>} : vector<64x96xf32>, vector<96x168xf32>, vector<64x168xf32> -> vector<64x168xf32>
    %28 = arith.addf %23, %27 : vector<64x168xf32>
    %c60_i32 = arith.constant 60 : i32
    %29 = tpu.dynamic_rotate %10 by %c60_i32 dim 0 : vector<64x96xf32>, i32 -> vector<64x96xf32>
    %c4 = arith.constant 4 : index
    %c0_15 = arith.constant 0 : index
    %c0_16 = arith.constant 0 : index
    %30 = vector.load %arg2[%c4, %c0_15, %c0_16] : memref<5x96x168xf32, #tpu.memory_space<vmem>>, vector<1x96x168xf32>
    %31 = vector.shape_cast %30 : vector<1x96x168xf32> to vector<96x168xf32>
    %cst_17 = arith.constant dense<0.000000e+00> : vector<64x168xf32>
    %32 = tpu.matmul %29, %31, %cst_17 {dimension_numbers = #tpu.dot_dimension_numbers<[1], [0], [0], [1], [0, 0, 1, 1], [], []>} : vector<64x96xf32>, vector<96x168xf32>, vector<64x168xf32> -> vector<64x168xf32>
    %33 = arith.addf %28, %32 : vector<64x168xf32>
    %c0_18 = arith.constant 0 : index
    %c0_19 = arith.constant 0 : index
    %34 = vector.load %arg3[%c0_18, %c0_19] : memref<1x84xf32, #tpu.memory_space<vmem>>, vector<1x84xf32>
    %35 = vector.extract_strided_slice %33 {offsets = [0, 0], sizes = [64, 84], strides = [1, 1]} : vector<64x168xf32> to vector<64x84xf32>
    %36 = vector.broadcast %34 : vector<1x84xf32> to vector<64x84xf32>
    %37 = arith.addf %35, %36 : vector<64x84xf32>
    %cst_20 = arith.constant 0.000000e+00 : f32
    %38 = vector.broadcast %cst_20 : f32 to vector<64x84xf32>
    %39 = arith.maximumf %37, %38 : vector<64x84xf32>
    %40 = vector.extract_strided_slice %33 {offsets = [0, 84], sizes = [64, 84], strides = [1, 1]} : vector<64x168xf32> to vector<64x84xf32>
    %41 = vector.broadcast %34 : vector<1x84xf32> to vector<64x84xf32>
    %42 = arith.addf %40, %41 : vector<64x84xf32>
    %cst_21 = arith.constant 0.000000e+00 : f32
    %43 = vector.broadcast %cst_21 : f32 to vector<64x84xf32>
    %44 = arith.maximumf %42, %43 : vector<64x84xf32>
    %45 = arith.maximumf %39, %44 : vector<64x84xf32>
    %c63_i32_22 = arith.constant 63 : i32
    %46 = tpu.dynamic_rotate %45 by %c63_i32_22 dim 0 : vector<64x84xf32>, i32 -> vector<64x84xf32>
    %47 = arith.maximumf %45, %46 : vector<64x84xf32>
    %c0_23 = arith.constant 0 : index
    %c0_24 = arith.constant 0 : index
    %c0_25 = arith.constant 0 : index
    %48 = vector.load %arg4[%c0_23, %c0_24, %c0_25] : memref<5x84x160xf32, #tpu.memory_space<vmem>>, vector<1x84x160xf32>
    %49 = vector.shape_cast %48 : vector<1x84x160xf32> to vector<84x160xf32>
    %cst_26 = arith.constant dense<0.000000e+00> : vector<64x160xf32>
    %50 = tpu.matmul %47, %49, %cst_26 {dimension_numbers = #tpu.dot_dimension_numbers<[1], [0], [0], [1], [0, 0, 1, 1], [], []>} : vector<64x84xf32>, vector<84x160xf32>, vector<64x160xf32> -> vector<64x160xf32>
    %c62_i32_27 = arith.constant 62 : i32
    %51 = tpu.dynamic_rotate %47 by %c62_i32_27 dim 0 : vector<64x84xf32>, i32 -> vector<64x84xf32>
    %c1_28 = arith.constant 1 : index
    %c0_29 = arith.constant 0 : index
    %c0_30 = arith.constant 0 : index
    %52 = vector.load %arg4[%c1_28, %c0_29, %c0_30] : memref<5x84x160xf32, #tpu.memory_space<vmem>>, vector<1x84x160xf32>
    %53 = vector.shape_cast %52 : vector<1x84x160xf32> to vector<84x160xf32>
    %cst_31 = arith.constant dense<0.000000e+00> : vector<64x160xf32>
    %54 = tpu.matmul %51, %53, %cst_31 {dimension_numbers = #tpu.dot_dimension_numbers<[1], [0], [0], [1], [0, 0, 1, 1], [], []>} : vector<64x84xf32>, vector<84x160xf32>, vector<64x160xf32> -> vector<64x160xf32>
    %55 = arith.addf %50, %54 : vector<64x160xf32>
    %c60_i32_32 = arith.constant 60 : i32
    %56 = tpu.dynamic_rotate %47 by %c60_i32_32 dim 0 : vector<64x84xf32>, i32 -> vector<64x84xf32>
    %c2_33 = arith.constant 2 : index
    %c0_34 = arith.constant 0 : index
    %c0_35 = arith.constant 0 : index
    %57 = vector.load %arg4[%c2_33, %c0_34, %c0_35] : memref<5x84x160xf32, #tpu.memory_space<vmem>>, vector<1x84x160xf32>
    %58 = vector.shape_cast %57 : vector<1x84x160xf32> to vector<84x160xf32>
    %cst_36 = arith.constant dense<0.000000e+00> : vector<64x160xf32>
    %59 = tpu.matmul %56, %58, %cst_36 {dimension_numbers = #tpu.dot_dimension_numbers<[1], [0], [0], [1], [0, 0, 1, 1], [], []>} : vector<64x84xf32>, vector<84x160xf32>, vector<64x160xf32> -> vector<64x160xf32>
    %60 = arith.addf %55, %59 : vector<64x160xf32>
    %c58_i32 = arith.constant 58 : i32
    %61 = tpu.dynamic_rotate %47 by %c58_i32 dim 0 : vector<64x84xf32>, i32 -> vector<64x84xf32>
    %c3_37 = arith.constant 3 : index
    %c0_38 = arith.constant 0 : index
    %c0_39 = arith.constant 0 : index
    %62 = vector.load %arg4[%c3_37, %c0_38, %c0_39] : memref<5x84x160xf32, #tpu.memory_space<vmem>>, vector<1x84x160xf32>
    %63 = vector.shape_cast %62 : vector<1x84x160xf32> to vector<84x160xf32>
    %cst_40 = arith.constant dense<0.000000e+00> : vector<64x160xf32>
    %64 = tpu.matmul %61, %63, %cst_40 {dimension_numbers = #tpu.dot_dimension_numbers<[1], [0], [0], [1], [0, 0, 1, 1], [], []>} : vector<64x84xf32>, vector<84x160xf32>, vector<64x160xf32> -> vector<64x160xf32>
    %65 = arith.addf %60, %64 : vector<64x160xf32>
    %c56_i32 = arith.constant 56 : i32
    %66 = tpu.dynamic_rotate %47 by %c56_i32 dim 0 : vector<64x84xf32>, i32 -> vector<64x84xf32>
    %c4_41 = arith.constant 4 : index
    %c0_42 = arith.constant 0 : index
    %c0_43 = arith.constant 0 : index
    %67 = vector.load %arg4[%c4_41, %c0_42, %c0_43] : memref<5x84x160xf32, #tpu.memory_space<vmem>>, vector<1x84x160xf32>
    %68 = vector.shape_cast %67 : vector<1x84x160xf32> to vector<84x160xf32>
    %cst_44 = arith.constant dense<0.000000e+00> : vector<64x160xf32>
    %69 = tpu.matmul %66, %68, %cst_44 {dimension_numbers = #tpu.dot_dimension_numbers<[1], [0], [0], [1], [0, 0, 1, 1], [], []>} : vector<64x84xf32>, vector<84x160xf32>, vector<64x160xf32> -> vector<64x160xf32>
    %70 = arith.addf %65, %69 : vector<64x160xf32>
    %c0_45 = arith.constant 0 : index
    %c0_46 = arith.constant 0 : index
    %71 = vector.load %arg5[%c0_45, %c0_46] : memref<1x80xf32, #tpu.memory_space<vmem>>, vector<1x80xf32>
    %72 = vector.extract_strided_slice %70 {offsets = [0, 0], sizes = [64, 80], strides = [1, 1]} : vector<64x160xf32> to vector<64x80xf32>
    %73 = vector.broadcast %71 : vector<1x80xf32> to vector<64x80xf32>
    %74 = arith.addf %72, %73 : vector<64x80xf32>
    %cst_47 = arith.constant 0.000000e+00 : f32
    %75 = vector.broadcast %cst_47 : f32 to vector<64x80xf32>
    %76 = arith.maximumf %74, %75 : vector<64x80xf32>
    %77 = vector.extract_strided_slice %70 {offsets = [0, 80], sizes = [64, 80], strides = [1, 1]} : vector<64x160xf32> to vector<64x80xf32>
    %78 = vector.broadcast %71 : vector<1x80xf32> to vector<64x80xf32>
    %79 = arith.addf %77, %78 : vector<64x80xf32>
    %cst_48 = arith.constant 0.000000e+00 : f32
    %80 = vector.broadcast %cst_48 : f32 to vector<64x80xf32>
    %81 = arith.maximumf %79, %80 : vector<64x80xf32>
    %82 = arith.maximumf %76, %81 : vector<64x80xf32>
    %c62_i32_49 = arith.constant 62 : i32
    %83 = tpu.dynamic_rotate %82 by %c62_i32_49 dim 0 : vector<64x80xf32>, i32 -> vector<64x80xf32>
    %84 = arith.maximumf %82, %83 : vector<64x80xf32>
    %85 = vector.shape_cast %84 : vector<64x80xf32> to vector<2x32x80xf32>
    %86 = vector.extract_strided_slice %85 {offsets = [0, 0, 0], sizes = [2, 1, 80], strides = [1, 1, 1]} : vector<2x32x80xf32> to vector<2x1x80xf32>
    %87 = vector.shape_cast %86 : vector<2x1x80xf32> to vector<2x80xf32>
    %88 = vector.extract_strided_slice %85 {offsets = [0, 4, 0], sizes = [2, 1, 80], strides = [1, 1, 1]} : vector<2x32x80xf32> to vector<2x1x80xf32>
    %89 = vector.shape_cast %88 : vector<2x1x80xf32> to vector<2x80xf32>
    %90 = vector.extract_strided_slice %85 {offsets = [0, 8, 0], sizes = [2, 1, 80], strides = [1, 1, 1]} : vector<2x32x80xf32> to vector<2x1x80xf32>
    %91 = vector.shape_cast %90 : vector<2x1x80xf32> to vector<2x80xf32>
    %92 = vector.extract_strided_slice %85 {offsets = [0, 12, 0], sizes = [2, 1, 80], strides = [1, 1, 1]} : vector<2x32x80xf32> to vector<2x1x80xf32>
    %93 = vector.shape_cast %92 : vector<2x1x80xf32> to vector<2x80xf32>
    %94 = vector.extract_strided_slice %85 {offsets = [0, 16, 0], sizes = [2, 1, 80], strides = [1, 1, 1]} : vector<2x32x80xf32> to vector<2x1x80xf32>
    %95 = vector.shape_cast %94 : vector<2x1x80xf32> to vector<2x80xf32>
    %96 = tpu.concatenate %87, %89, %91, %93, %95 in 1 : vector<2x80xf32>, vector<2x80xf32>, vector<2x80xf32>, vector<2x80xf32>, vector<2x80xf32> -> vector<2x400xf32>
    %c0_50 = arith.constant 0 : index
    %c0_51 = arith.constant 0 : index
    %97 = vector.load %arg6[%c0_50, %c0_51] : memref<400x120xf32, #tpu.memory_space<vmem>>, vector<400x120xf32>
    %cst_52 = arith.constant dense<0.000000e+00> : vector<2x120xf32>
    %98 = tpu.matmul %96, %97, %cst_52 {dimension_numbers = #tpu.dot_dimension_numbers<[1], [0], [0], [1], [0, 0, 1, 1], [], []>} : vector<2x400xf32>, vector<400x120xf32>, vector<2x120xf32> -> vector<2x120xf32>
    %c0_53 = arith.constant 0 : index
    %c0_54 = arith.constant 0 : index
    %99 = vector.load %arg7[%c0_53, %c0_54] : memref<1x120xf32, #tpu.memory_space<vmem>>, vector<1x120xf32>
    %100 = vector.broadcast %99 : vector<1x120xf32> to vector<2x120xf32>
    %101 = arith.addf %98, %100 : vector<2x120xf32>
    %cst_55 = arith.constant 0.000000e+00 : f32
    %102 = vector.broadcast %cst_55 : f32 to vector<2x120xf32>
    %103 = arith.maximumf %101, %102 : vector<2x120xf32>
    %c0_56 = arith.constant 0 : index
    %c0_57 = arith.constant 0 : index
    %104 = vector.load %arg8[%c0_56, %c0_57] : memref<120x84xf32, #tpu.memory_space<vmem>>, vector<120x84xf32>
    %cst_58 = arith.constant dense<0.000000e+00> : vector<2x84xf32>
    %105 = tpu.matmul %103, %104, %cst_58 {dimension_numbers = #tpu.dot_dimension_numbers<[1], [0], [0], [1], [0, 0, 1, 1], [], []>} : vector<2x120xf32>, vector<120x84xf32>, vector<2x84xf32> -> vector<2x84xf32>
    %c0_59 = arith.constant 0 : index
    %c0_60 = arith.constant 0 : index
    %106 = vector.load %arg9[%c0_59, %c0_60] : memref<1x84xf32, #tpu.memory_space<vmem>>, vector<1x84xf32>
    %107 = vector.broadcast %106 : vector<1x84xf32> to vector<2x84xf32>
    %108 = arith.addf %105, %107 : vector<2x84xf32>
    %cst_61 = arith.constant 0.000000e+00 : f32
    %109 = vector.broadcast %cst_61 : f32 to vector<2x84xf32>
    %110 = arith.maximumf %108, %109 : vector<2x84xf32>
    %c0_62 = arith.constant 0 : index
    %c0_63 = arith.constant 0 : index
    %111 = vector.load %arg10[%c0_62, %c0_63] : memref<84x128xf32, #tpu.memory_space<vmem>>, vector<84x128xf32>
    %cst_64 = arith.constant dense<0.000000e+00> : vector<2x128xf32>
    %112 = tpu.matmul %110, %111, %cst_64 {dimension_numbers = #tpu.dot_dimension_numbers<[1], [0], [0], [1], [0, 0, 1, 1], [], []>} : vector<2x84xf32>, vector<84x128xf32>, vector<2x128xf32> -> vector<2x128xf32>
    %c0_65 = arith.constant 0 : index
    %c0_66 = arith.constant 0 : index
    %113 = vector.load %arg11[%c0_65, %c0_66] : memref<1x128xf32, #tpu.memory_space<vmem>>, vector<1x128xf32>
    %114 = vector.broadcast %113 : vector<1x128xf32> to vector<2x128xf32>
    %115 = arith.addf %112, %114 : vector<2x128xf32>
    %c0_67 = arith.constant 0 : index
    %c0_68 = arith.constant 0 : index
    %116 = vector.load %arg12[%c0_67, %c0_68] : memref<2x128xf32, #tpu.memory_space<vmem>>, vector<2x128xf32>
    tpu.vector_store %arg12[%c0_67, %c0_68], %115 {strides = array<i32>} : memref<2x128xf32, #tpu.memory_space<vmem>>, vector<2x128xf32>,
    return
  }
  func.func @transform_0(%arg0: i32) -> (i32, i32, i32, i32) {
    %c0_i32 = arith.constant 0 : i32
    %c0_i32_0 = arith.constant 0 : i32
    %c0_i32_1 = arith.constant 0 : i32
    %c0_i32_2 = arith.constant 0 : i32
    return %arg0, %c0_i32, %c0_i32_0, %c0_i32_1 : i32, i32, i32, i32
  }
  func.func @transform_1(%arg0: i32) -> (i32, i32, i32) {
    %c0_i32 = arith.constant 0 : i32
    %c0_i32_0 = arith.constant 0 : i32
    %c0_i32_1 = arith.constant 0 : i32
    %c0_i32_2 = arith.constant 0 : i32
    return %c0_i32, %c0_i32_0, %c0_i32_1 : i32, i32, i32
  }
  func.func @transform_2(%arg0: i32) -> (i32, i32) {
    %c0_i32 = arith.constant 0 : i32
    %c0_i32_0 = arith.constant 0 : i32
    %c0_i32_1 = arith.constant 0 : i32
    return %c0_i32, %c0_i32_0 : i32, i32
  }
  func.func @transform_3(%arg0: i32) -> (i32, i32, i32) {
    %c0_i32 = arith.constant 0 : i32
    %c0_i32_0 = arith.constant 0 : i32
    %c0_i32_1 = arith.constant 0 : i32
    %c0_i32_2 = arith.constant 0 : i32
    return %c0_i32, %c0_i32_0, %c0_i32_1 : i32, i32, i32
  }
  func.func @transform_4(%arg0: i32) -> (i32, i32) {
    %c0_i32 = arith.constant 0 : i32
    %c0_i32_0 = arith.constant 0 : i32
    %c0_i32_1 = arith.constant 0 : i32
    return %c0_i32, %c0_i32_0 : i32, i32
  }
  func.func @transform_5(%arg0: i32) -> (i32, i32) {
    %c0_i32 = arith.constant 0 : i32
    %c0_i32_0 = arith.constant 0 : i32
    %c0_i32_1 = arith.constant 0 : i32
    return %c0_i32, %c0_i32_0 : i32, i32
  }
  func.func @transform_6(%arg0: i32) -> (i32, i32) {
    %c0_i32 = arith.constant 0 : i32
    %c0_i32_0 = arith.constant 0 : i32
    %c0_i32_1 = arith.constant 0 : i32
    return %c0_i32, %c0_i32_0 : i32, i32
  }
  func.func @transform_7(%arg0: i32) -> (i32, i32) {
    %c0_i32 = arith.constant 0 : i32
    %c0_i32_0 = arith.constant 0 : i32
    %c0_i32_1 = arith.constant 0 : i32
    return %c0_i32, %c0_i32_0 : i32, i32
  }
  func.func @transform_8(%arg0: i32) -> (i32, i32) {
    %c0_i32 = arith.constant 0 : i32
    %c0_i32_0 = arith.constant 0 : i32
    %c0_i32_1 = arith.constant 0 : i32
    return %c0_i32, %c0_i32_0 : i32, i32
  }
  func.func @transform_9(%arg0: i32) -> (i32, i32) {
    %c0_i32 = arith.constant 0 : i32
    %c0_i32_0 = arith.constant 0 : i32
    %c0_i32_1 = arith.constant 0 : i32
    return %c0_i32, %c0_i32_0 : i32, i32
  }
  func.func @transform_10(%arg0: i32) -> (i32, i32) {
    %c0_i32 = arith.constant 0 : i32
    %c0_i32_0 = arith.constant 0 : i32
    %c0_i32_1 = arith.constant 0 : i32
    return %c0_i32, %c0_i32_0 : i32, i32
  }
  func.func @transform_11(%arg0: i32) -> (i32, i32) {
    %c0_i32 = arith.constant 0 : i32
    %c0_i32_0 = arith.constant 0 : i32
    return %arg0, %c0_i32 : i32, i32
  }
}

</mosaic_0001>

<llo_original>
// kernel: net_forward.1
$region0: #{net_forward.1}
  #allocation0 [shape = 'u32[]', space=smem, size = 0x4, offset = 0x4, fixed_abs, tag = 'smem constant byte address 0x4 - core index']
  #allocation1 [shape = 'u32[144,128]{1,0:T(1,128)}', space=vmem, size = 0x12000, scoped, tag = 'internal scratch']
  %s0 = inlined_call_operand.vmem [shape: f32[2,3,32,32], index: 0, kind: input, shape index: {}]
  %s1 = inlined_call_operand.vmem [shape: f32[5,96,168], index: 1, kind: input, shape index: {}]
  %s2 = inlined_call_operand.vmem [shape: f32[1,84], index: 2, kind: input, shape index: {}]
  %s3 = inlined_call_operand.vmem [shape: f32[5,84,160], index: 3, kind: input, shape index: {}]
  %s4 = inlined_call_operand.vmem [shape: f32[1,80], index: 4, kind: input, shape index: {}]
  %s5 = inlined_call_operand.vmem [shape: f32[400,120], index: 5, kind: input, shape index: {}]
  %s6 = inlined_call_operand.vmem [shape: f32[1,120], index: 6, kind: input, shape index: {}]
  %s7 = inlined_call_operand.vmem [shape: f32[120,84], index: 7, kind: input, shape index: {}]
  %s8 = inlined_call_operand.vmem [shape: f32[1,84], index: 8, kind: input, shape index: {}]
  %s9 = inlined_call_operand.vmem [shape: f32[84,128], index: 9, kind: input, shape index: {}]
  %s10 = inlined_call_operand.vmem [shape: f32[1,128], index: 10, kind: input, shape index: {}]
  %s11 = inlined_call_operand.hbm [shape: f32[2,128], index: 11, kind: output, shape index: {}]
  %s12 = sld [smem:[#allocation0]]
  $region54: #{net_forward.1} parent=0
    _
  %s14 = ssub.s32 1, %s12
  %s15 = scalar_select 0, %s14, %s12
  $region1: #{net_forward.1} parent=0
    #allocation2 [shape = 'u8[1024]{0}', space=vmem, size = 0x400, scoped, tag = 'output window, operand 0, single buffered']
    #allocation3 [shape = 's32[1]{0}', space=sflag, size = 0x4, scoped, tag = 'scoped memory for net_forward.1']
    %16 = vsyncpa [#allocation3], 0
    // Predicated region
    $region2: #{net_forward.1} parent=1 // pred_check
      _
    $region3: #{net_forward.1} parent=1 // pred_check_branch
      %18 = sbr.rel (0) target = $region5
    $region4: #{net_forward.1} parent=1 // pred_region
      _
    $region5: #{net_forward.1} parent=1 // pred_fallthru
      _
    // Predicated region
    $region6: #{net_forward.1} parent=1 // pred_check
      _
    $region7: #{net_forward.1} parent=1 // pred_check_branch
      %20 = sbr.rel (0) target = $region9
    $region8: #{net_forward.1} parent=1 // pred_region
      _
    $region9: #{net_forward.1} parent=1 // pred_fallthru
      _
    // Predicated region
    $region10: #{net_forward.1} parent=1 // pred_check
      _
    $region11: #{net_forward.1} parent=1 // pred_check_branch
      %22 = sbr.rel (0) target = $region13
    $region12: #{net_forward.1} parent=1 // pred_region
      _
    $region13: #{net_forward.1} parent=1 // pred_fallthru
      _
    // Predicated region
    $region14: #{net_forward.1} parent=1 // pred_check
      _
    $region15: #{net_forward.1} parent=1 // pred_check_branch
      %24 = sbr.rel (0) target = $region17
    $region16: #{net_forward.1} parent=1 // pred_region
      _
    $region17: #{net_forward.1} parent=1 // pred_fallthru
      _
    // Predicated region
    $region18: #{net_forward.1} parent=1 // pred_check
      _
    $region19: #{net_forward.1} parent=1 // pred_check_branch
      %26 = sbr.rel (0) target = $region21
    $region20: #{net_forward.1} parent=1 // pred_region
      _
    $region21: #{net_forward.1} parent=1 // pred_fallthru
      _
    // Predicated region
    $region22: #{net_forward.1} parent=1 // pred_check
      _
    $region23: #{net_forward.1} parent=1 // pred_check_branch
      %28 = sbr.rel (0) target = $region25
    $region24: #{net_forward.1} parent=1 // pred_region
      _
    $region25: #{net_forward.1} parent=1 // pred_fallthru
      _
    // Predicated region
    $region26: #{net_forward.1} parent=1 // pred_check
      _
    $region27: #{net_forward.1} parent=1 // pred_check_branch
      %30 = sbr.rel (0) target = $region29
    $region28: #{net_forward.1} parent=1 // pred_region
      _
    $region29: #{net_forward.1} parent=1 // pred_fallthru
      _
    // Predicated region
    $region30: #{net_forward.1} parent=1 // pred_check
      _
    $region31: #{net_forward.1} parent=1 // pred_check_branch
      %32 = sbr.rel (0) target = $region33
    $region32: #{net_forward.1} parent=1 // pred_region
      _
    $region33: #{net_forward.1} parent=1 // pred_fallthru
      _
    // Predicated region
    $region34: #{net_forward.1} parent=1 // pred_check
      _
    $region35: #{net_forward.1} parent=1 // pred_check_branch
      %34 = sbr.rel (0) target = $region37
    $region36: #{net_forward.1} parent=1 // pred_region
      _
    $region37: #{net_forward.1} parent=1 // pred_fallthru
      _
    // Predicated region
    $region38: #{net_forward.1} parent=1 // pred_check
      _
    $region39: #{net_forward.1} parent=1 // pred_check_branch
      %36 = sbr.rel (0) target = $region41
    $region40: #{net_forward.1} parent=1 // pred_region
      _
    $region41: #{net_forward.1} parent=1 // pred_fallthru
      _
    // Predicated region
    $region42: #{net_forward.1} parent=1 // pred_check
      _
    $region43: #{net_forward.1} parent=1 // pred_check_branch
      %38 = sbr.rel (0) target = $region45
    $region44: #{net_forward.1} parent=1 // pred_region
      _
    $region45: #{net_forward.1} parent=1 // pred_fallthru
      _
    %v39 = vld [vmem:[%s0] sm:$0xff]
    %v40 = vld [vmem:[%s0 + $0x8] sm:$0xff]
    %v41 = vld [vmem:[%s0 + $0x10] sm:$0xff]
    %v42 = vld [vmem:[%s0 + $0x18] sm:$0xff]
    %v43 = vld [vmem:[%s0 + $0x20] sm:$0xff]
    %v44 = vld [vmem:[%s0 + $0x28] sm:$0xff]
    %v45 = vld [vmem:[%s0 + $0x30] sm:$0xff]
    %v46 = vld [vmem:[%s0 + $0x38] sm:$0xff]
    %v47 = vld [vmem:[%s0 + $0x40] sm:$0xff]
    %v48 = vld [vmem:[%s0 + $0x48] sm:$0xff]
    %v49 = vld [vmem:[%s0 + $0x50] sm:$0xff]
    %v50 = vld [vmem:[%s0 + $0x58] sm:$0xff]
    %v51 = vld [vmem:[%s0 + $0x60] sm:$0xff]
    %v52 = vld [vmem:[%s0 + $0x68] sm:$0xff]
    %v53 = vld [vmem:[%s0 + $0x70] sm:$0xff]
    %v54 = vld [vmem:[%s0 + $0x78] sm:$0xff]
    %v55 = vld [vmem:[%s0 + $0x80] sm:$0xff]
    %v56 = vld [vmem:[%s0 + $0x88] sm:$0xff]
    %v57 = vld [vmem:[%s0 + $0x90] sm:$0xff]
    %v58 = vld [vmem:[%s0 + $0x98] sm:$0xff]
    %v59 = vld [vmem:[%s0 + $0xa0] sm:$0xff]
    %v60 = vld [vmem:[%s0 + $0xa8] sm:$0xff]
    %v61 = vld [vmem:[%s0 + $0xb0] sm:$0xff]
    %v62 = vld [vmem:[%s0 + $0xb8] sm:$0xff]
    %71 = vrot.lane.b32.xlu0 %v43, 32
    %v72 = vpop.permute.xlu0 %71
    %73 = vrot.lane.b32.xlu0 %v44, 32
    %v74 = vpop.permute.xlu0 %73
    %75 = vrot.lane.b32.xlu0 %v45, 32
    %v76 = vpop.permute.xlu0 %75
    %77 = vrot.lane.b32.xlu0 %v46, 32
    %v78 = vpop.permute.xlu0 %77
    %79 = vrot.lane.b32.xlu0 %v55, 32
    %v80 = vpop.permute.xlu0 %79
    %81 = vrot.lane.b32.xlu0 %v56, 32
    %v82 = vpop.permute.xlu0 %81
    %83 = vrot.lane.b32.xlu0 %v57, 32
    %v84 = vpop.permute.xlu0 %83
    %85 = vrot.lane.b32.xlu0 %v58, 32
    %v86 = vpop.permute.xlu0 %85
    %103 = vrot.lane.b32.xlu0 %v47, 64
    %v104 = vpop.permute.xlu0 %103
    %105 = vrot.lane.b32.xlu0 %v48, 64
    %v106 = vpop.permute.xlu0 %105
    %107 = vrot.lane.b32.xlu0 %v49, 64
    %v108 = vpop.permute.xlu0 %107
    %109 = vrot.lane.b32.xlu0 %v50, 64
    %v110 = vpop.permute.xlu0 %109
    %111 = vrot.lane.b32.xlu0 %v59, 64
    %v112 = vpop.permute.xlu0 %111
    %113 = vrot.lane.b32.xlu0 %v60, 64
    %v114 = vpop.permute.xlu0 %113
    %115 = vrot.lane.b32.xlu0 %v61, 64
    %v116 = vpop.permute.xlu0 %115
    %117 = vrot.lane.b32.xlu0 %v62, 64
    %v118 = vpop.permute.xlu0 %117
    %vm127 = vcmask 261120
    %v128 = vsel %vm127, %v39, %v72
    %v129 = vsel %vm127, %v40, %v74
    %v130 = vsel %vm127, %v41, %v76
    %v131 = vsel %vm127, %v42, %v78
    %v132 = vsel %vm127, %v51, %v80
    %v133 = vsel %vm127, %v52, %v82
    %v134 = vsel %vm127, %v53, %v84
    %v135 = vsel %vm127, %v54, %v86
    %vm136 = vcmask 523264
    %v137 = vsel %vm136, %v128, %v104
    %v138 = vsel %vm136, %v129, %v106
    %v139 = vsel %vm136, %v130, %v108
    %v140 = vsel %vm136, %v131, %v110
    %v141 = vsel %vm136, %v132, %v112
    %v142 = vsel %vm136, %v133, %v114
    %v143 = vsel %vm136, %v134, %v116
    %v144 = vsel %vm136, %v135, %v118
    %v145 = vld [vmem:[%s1] sm:$0xff]
    %v146 = vld [vmem:[%s1 + $0x8] sm:$0xff]
    %v147 = vld [vmem:[%s1 + $0x10] sm:$0xff]
    %v148 = vld [vmem:[%s1 + $0x18] sm:$0xff]
    %v149 = vld [vmem:[%s1 + $0x20] sm:$0xff]
    %v150 = vld [vmem:[%s1 + $0x28] sm:$0xff]
    %v151 = vld [vmem:[%s1 + $0x30] sm:$0xff]
    %v152 = vld [vmem:[%s1 + $0x38] sm:$0xff]
    %v153 = vld [vmem:[%s1 + $0x40] sm:$0xff]
    %v154 = vld [vmem:[%s1 + $0x48] sm:$0xff]
    %v155 = vld [vmem:[%s1 + $0x50] sm:$0xff]
    %v156 = vld [vmem:[%s1 + $0x58] sm:$0xff]
    %v157 = vld [vmem:[%s1 + $0x60] sm:$0xff]
    %v158 = vld [vmem:[%s1 + $0x68] sm:$0xff]
    %v159 = vld [vmem:[%s1 + $0x70] sm:$0xff]
    %v160 = vld [vmem:[%s1 + $0x78] sm:$0xff]
    %v161 = vld [vmem:[%s1 + $0x80] sm:$0xff]
    %v162 = vld [vmem:[%s1 + $0x88] sm:$0xff]
    %v163 = vld [vmem:[%s1 + $0x90] sm:$0xff]
    %v164 = vld [vmem:[%s1 + $0x98] sm:$0xff]
    %v165 = vld [vmem:[%s1 + $0xa0] sm:$0xff]
    %v166 = vld [vmem:[%s1 + $0xa8] sm:$0xff]
    %v167 = vld [vmem:[%s1 + $0xb0] sm:$0xff]
    %v168 = vld [vmem:[%s1 + $0xb8] sm:$0xff]
    %v169 = vrot.slane %v137, 1
    %v170 = vrot.slane %v138, 1
    %v171 = vrot.slane %v139, 1
    %v172 = vrot.slane %v140, 1
    %v173 = vrot.slane %v141, 1
    %v174 = vrot.slane %v142, 1
    %v175 = vrot.slane %v143, 1
    %v176 = vrot.slane %v144, 1
    %v177 = vlaneseq
    %v178 = vshrl.u32 %v177, 7
    %vm179 = vcmp.lt.s32.totalorder %v178, 7
    %v180 = vsel %vm179, %v175, %v176
    %v181 = vsel %vm179, %v174, %v175
    %v182 = vsel %vm179, %v173, %v174
    %v183 = vsel %vm179, %v172, %v173
    %v184 = vsel %vm179, %v171, %v172
    %v185 = vsel %vm179, %v170, %v171
    %v186 = vsel %vm179, %v169, %v170
    %v187 = vsel %vm179, %v176, %v169
    %s188 = scalar_lea.vmem %s1, 192
    %v189 = vld [vmem:[%s188] sm:$0xff]
    %v190 = vld [vmem:[%s188 + $0x8] sm:$0xff]
    %v191 = vld [vmem:[%s188 + $0x10] sm:$0xff]
    %v192 = vld [vmem:[%s188 + $0x18] sm:$0xff]
    %v193 = vld [vmem:[%s188 + $0x20] sm:$0xff]
    %v194 = vld [vmem:[%s188 + $0x28] sm:$0xff]
    %v195 = vld [vmem:[%s188 + $0x30] sm:$0xff]
    %v196 = vld [vmem:[%s188 + $0x38] sm:$0xff]
    %v197 = vld [vmem:[%s188 + $0x40] sm:$0xff]
    %v198 = vld [vmem:[%s188 + $0x48] sm:$0xff]
    %v199 = vld [vmem:[%s188 + $0x50] sm:$0xff]
    %v200 = vld [vmem:[%s188 + $0x58] sm:$0xff]
    %v201 = vld [vmem:[%s188 + $0x60] sm:$0xff]
    %v202 = vld [vmem:[%s188 + $0x68] sm:$0xff]
    %v203 = vld [vmem:[%s188 + $0x70] sm:$0xff]
    %v204 = vld [vmem:[%s188 + $0x78] sm:$0xff]
    %v205 = vld [vmem:[%s188 + $0x80] sm:$0xff]
    %v206 = vld [vmem:[%s188 + $0x88] sm:$0xff]
    %v207 = vld [vmem:[%s188 + $0x90] sm:$0xff]
    %v208 = vld [vmem:[%s188 + $0x98] sm:$0xff]
    %v209 = vld [vmem:[%s188 + $0xa0] sm:$0xff]
    %v210 = vld [vmem:[%s188 + $0xa8] sm:$0xff]
    %v211 = vld [vmem:[%s188 + $0xb0] sm:$0xff]
    %v212 = vld [vmem:[%s188 + $0xb8] sm:$0xff]
    %vm213 = vcmask 785408
    %v215 = vsel %vm213, %v186, 0
    %v218 = vsel %vm213, %v185, 0
    %v221 = vsel %vm213, %v184, 0
    %v224 = vsel %vm213, %v183, 0
    %v227 = vsel %vm213, %v182, 0
    %v230 = vsel %vm213, %v181, 0
    %v233 = vsel %vm213, %v180, 0
    %v236 = vsel %vm213, %v187, 0
    %238 = vmatprep.subr.mxu0 %v190
    %239 = vmatpush1.msra.mxu0 %v189
    %240 = vmatprep.subr.mxu0 %v192
    %241 = vmatpush1.msra.mxu0 %v191
    %242 = vmatprep.subr.mxu0 %v194
    %243 = vmatpush1.msra.mxu0 %v193
    %244 = vmatprep.subr.mxu0 %v196
    %245 = vmatpush1.msra.mxu0 %v195
    %246 = vmatprep.subr.mxu0 %v198
    %247 = vmatpush1.msra.mxu0 %v197
    %248 = vmatprep.subr.mxu0 %v200
    %249 = vmatpush1.msra.mxu0 %v199
    %250 = vmatprep.subr.mxu0 %v202
    %251 = vmatpush1.msra.mxu0 %v201
    %252 = vmatprep.subr.mxu0 %v204
    %253 = vmatpush1.msra.mxu0 %v203
    %254 = vmatprep.subr.mxu0 %v206
    %255 = vmatpush1.msra.mxu0 %v205
    %256 = vmatprep.subr.mxu0 %v208
    %257 = vmatpush1.msra.mxu0 %v207
    %258 = vmatprep.subr.mxu0 %v210
    %259 = vmatpush1.msra.mxu0 %v209
    %260 = vmatprep.subr.mxu0 %v212
    %261 = vmatpush1.msra.mxu0 %v211
    %262 = vmatprep.subr.mxu0 0.0
    %263 = vmatpush1.msra.mxu0 0.0
    %264 = vmatprep.subr.mxu0 0.0
    %265 = vmatpush1.msra.mxu0 0.0
    %266 = vmatprep.subr.mxu0 0.0
    %267 = vmatpush1.msra.mxu0 0.0
    %268 = vmatprep.subr.mxu0 0.0
    %269 = vmatpush1.msra.mxu0 0.0
    %270 = vmatprep.subr.mxu0 0.0
    %271 = vmatpush1.msra.mxu0 0.0
    %272 = vmatprep.subr.mxu0 0.0
    %273 = vmatpush1.msra.mxu0 0.0
    %274 = vmatprep.subr.mxu0 0.0
    %275 = vmatpush1.msra.mxu0 0.0
    %276 = vmatprep.subr.mxu0 0.0
    %277 = vmatpush1.msra.mxu0 0.0
    %278 = vmatprep.subr.mxu0 0.0
    %279 = vmatpush1.msra.mxu0 0.0
    %280 = vmatprep.subr.mxu0 0.0
    %281 = vmatpush1.msra.mxu0 0.0
    %282 = vmatprep.subr.mxu0 0.0
    %283 = vmatpush1.msra.mxu0 0.0
    %284 = vmatprep.subr.mxu0 0.0
    %285 = vmatpush1.msra.mxu0 0.0
    %286 = vmatprep.subr.mxu0 0.0
    %287 = vmatpush1.msra.mxu0 0.0
    %288 = vmatprep.subr.mxu0 0.0
    %289 = vmatpush1.msra.mxu0 0.0
    %290 = vmatprep.subr.mxu0 0.0
    %291 = vmatpush1.msra.mxu0 0.0
    %292 = vmatprep.subr.mxu0 0.0
    %293 = vmatpush1.msra.mxu0 0.0
    %294 = vmatprep.subr.mxu0 0.0
    %295 = vmatpush1.msra.mxu0 0.0
    %296 = vmatprep.subr.mxu0 0.0
    %297 = vmatpush1.msra.mxu0 0.0
    %298 = vmatprep.subr.mxu0 0.0
    %299 = vmatpush1.msra.mxu0 0.0
    %300 = vmatprep.subr.mxu0 0.0
    %301 = vmatpush1.msra.mxu0 0.0
    %302 = vmatprep.mubr.f32.mxu0 0.0
    %303 = vmatmul.mubr.f32.gmra.mrb[0].mxu0 %v215
    %v304 = vpop.f32.mrb[0].mxu0
    %v305 = vadd.f32 0.0, %v304
    %v306 = vpop.f32.mrb[0].mxu0
    %v307 = vadd.f32 0.0, %v306
    %308 = vmatprep.mubr.f32.mxu0 0.0
    %309 = vmatmul.mubr.f32.gmra.mrb[0].mxu0 %v218
    %v310 = vpop.f32.mrb[0].mxu0
    %v311 = vadd.f32 0.0, %v310
    %v312 = vpop.f32.mrb[0].mxu0
    %v313 = vadd.f32 0.0, %v312
    %314 = vmatprep.mubr.f32.mxu0 0.0
    %315 = vmatmul.mubr.f32.gmra.mrb[0].mxu0 %v221
    %v316 = vpop.f32.mrb[0].mxu0
    %v317 = vadd.f32 0.0, %v316
    %v318 = vpop.f32.mrb[0].mxu0
    %v319 = vadd.f32 0.0, %v318
    %320 = vmatprep.mubr.f32.mxu0 0.0
    %321 = vmatmul.mubr.f32.gmra.mrb[0].mxu0 %v224
    %v322 = vpop.f32.mrb[0].mxu0
    %v323 = vadd.f32 0.0, %v322
    %v324 = vpop.f32.mrb[0].mxu0
    %v325 = vadd.f32 0.0, %v324
    %326 = vmatprep.mubr.f32.mxu0 0.0
    %327 = vmatmul.mubr.f32.gmra.mrb[0].mxu0 %v227
    %v328 = vpop.f32.mrb[0].mxu0
    %v329 = vadd.f32 0.0, %v328
    %v330 = vpop.f32.mrb[0].mxu0
    %v331 = vadd.f32 0.0, %v330
    %332 = vmatprep.mubr.f32.mxu0 0.0
    %333 = vmatmul.mubr.f32.gmra.mrb[0].mxu0 %v230
    %v334 = vpop.f32.mrb[0].mxu0
    %v335 = vadd.f32 0.0, %v334
    %v336 = vpop.f32.mrb[0].mxu0
    %v337 = vadd.f32 0.0, %v336
    %338 = vmatprep.mubr.f32.mxu0 0.0
    %339 = vmatmul.mubr.f32.gmra.mrb[0].mxu0 %v233
    %v340 = vpop.f32.mrb[0].mxu0
    %v341 = vadd.f32 0.0, %v340
    %v342 = vpop.f32.mrb[0].mxu0
    %v343 = vadd.f32 0.0, %v342
    %344 = vmatprep.mubr.f32.mxu0 0.0
    %345 = vmatmul.mubr.f32.gmra.mrb[0].mxu0 %v236
    %v346 = vpop.f32.mrb[0].mxu0
    %v347 = vadd.f32 0.0, %v346
    %v348 = vpop.f32.mrb[0].mxu0
    %v349 = vadd.f32 0.0, %v348
    %350 = vdwg.mxu0
    %v352 = vsel %vm213, %v137, 0
    %v355 = vsel %vm213, %v138, 0
    %v358 = vsel %vm213, %v139, 0
    %v361 = vsel %vm213, %v140, 0
    %v364 = vsel %vm213, %v141, 0
    %v367 = vsel %vm213, %v142, 0
    %v370 = vsel %vm213, %v143, 0
    %v373 = vsel %vm213, %v144, 0
    %375 = vmatprep.subr.mxu0 %v146
    %376 = vmatpush1.msra.mxu0 %v145
    %377 = vmatprep.subr.mxu0 %v148
    %378 = vmatpush1.msra.mxu0 %v147
    %379 = vmatprep.subr.mxu0 %v150
    %380 = vmatpush1.msra.mxu0 %v149
    %381 = vmatprep.subr.mxu0 %v152
    %382 = vmatpush1.msra.mxu0 %v151
    %383 = vmatprep.subr.mxu0 %v154
    %384 = vmatpush1.msra.mxu0 %v153
    %385 = vmatprep.subr.mxu0 %v156
    %386 = vmatpush1.msra.mxu0 %v155
    %387 = vmatprep.subr.mxu0 %v158
    %388 = vmatpush1.msra.mxu0 %v157
    %389 = vmatprep.subr.mxu0 %v160
    %390 = vmatpush1.msra.mxu0 %v159
    %391 = vmatprep.subr.mxu0 %v162
    %392 = vmatpush1.msra.mxu0 %v161
    %393 = vmatprep.subr.mxu0 %v164
    %394 = vmatpush1.msra.mxu0 %v163
    %395 = vmatprep.subr.mxu0 %v166
    %396 = vmatpush1.msra.mxu0 %v165
    %397 = vmatprep.subr.mxu0 %v168
    %398 = vmatpush1.msra.mxu0 %v167
    %399 = vmatprep.subr.mxu0 0.0
    %400 = vmatpush1.msra.mxu0 0.0
    %401 = vmatprep.subr.mxu0 0.0
    %402 = vmatpush1.msra.mxu0 0.0
    %403 = vmatprep.subr.mxu0 0.0
    %404 = vmatpush1.msra.mxu0 0.0
    %405 = vmatprep.subr.mxu0 0.0
    %406 = vmatpush1.msra.mxu0 0.0
    %407 = vmatprep.subr.mxu0 0.0
    %408 = vmatpush1.msra.mxu0 0.0
    %409 = vmatprep.subr.mxu0 0.0
    %410 = vmatpush1.msra.mxu0 0.0
    %411 = vmatprep.subr.mxu0 0.0
    %412 = vmatpush1.msra.mxu0 0.0
    %413 = vmatprep.subr.mxu0 0.0
    %414 = vmatpush1.msra.mxu0 0.0
    %415 = vmatprep.subr.mxu0 0.0
    %416 = vmatpush1.msra.mxu0 0.0
    %417 = vmatprep.subr.mxu0 0.0
    %418 = vmatpush1.msra.mxu0 0.0
    %419 = vmatprep.subr.mxu0 0.0
    %420 = vmatpush1.msra.mxu0 0.0
    %421 = vmatprep.subr.mxu0 0.0
    %422 = vmatpush1.msra.mxu0 0.0
    %423 = vmatprep.subr.mxu0 0.0
    %424 = vmatpush1.msra.mxu0 0.0
    %425 = vmatprep.subr.mxu0 0.0
    %426 = vmatpush1.msra.mxu0 0.0
    %427 = vmatprep.subr.mxu0 0.0
    %428 = vmatpush1.msra.mxu0 0.0
    %429 = vmatprep.subr.mxu0 0.0
    %430 = vmatpush1.msra.mxu0 0.0
    %431 = vmatprep.subr.mxu0 0.0
    %432 = vmatpush1.msra.mxu0 0.0
    %433 = vmatprep.subr.mxu0 0.0
    %434 = vmatpush1.msra.mxu0 0.0
    %435 = vmatprep.subr.mxu0 0.0
    %436 = vmatpush1.msra.mxu0 0.0
    %437 = vmatprep.subr.mxu0 0.0
    %438 = vmatpush1.msra.mxu0 0.0
    %439 = vmatprep.mubr.f32.mxu0 0.0
    %440 = vmatmul.mubr.f32.gmra.mrb[0].mxu0 %v352
    %v441 = vpop.f32.mrb[0].mxu0
    %v442 = vadd.f32 %v305, %v441
    %v443 = vpop.f32.mrb[0].mxu0
    %v444 = vadd.f32 %v307, %v443
    %445 = vmatprep.mubr.f32.mxu0 0.0
    %446 = vmatmul.mubr.f32.gmra.mrb[0].mxu0 %v355
    %v447 = vpop.f32.mrb[0].mxu0
    %v448 = vadd.f32 %v311, %v447
    %v449 = vpop.f32.mrb[0].mxu0
    %v450 = vadd.f32 %v313, %v449
    %451 = vmatprep.mubr.f32.mxu0 0.0
    %452 = vmatmul.mubr.f32.gmra.mrb[0].mxu0 %v358
    %v453 = vpop.f32.mrb[0].mxu0
    %v454 = vadd.f32 %v317, %v453
    %v455 = vpop.f32.mrb[0].mxu0
    %v456 = vadd.f32 %v319, %v455
    %457 = vmatprep.mubr.f32.mxu0 0.0
    %458 = vmatmul.mubr.f32.gmra.mrb[0].mxu0 %v361
    %v459 = vpop.f32.mrb[0].mxu0
    %v460 = vadd.f32 %v323, %v459
    %v461 = vpop.f32.mrb[0].mxu0
    %v462 = vadd.f32 %v325, %v461
    %463 = vmatprep.mubr.f32.mxu0 0.0
    %464 = vmatmul.mubr.f32.gmra.mrb[0].mxu0 %v364
    %v465 = vpop.f32.mrb[0].mxu0
    %v466 = vadd.f32 %v329, %v465
    %v467 = vpop.f32.mrb[0].mxu0
    %v468 = vadd.f32 %v331, %v467
    %469 = vmatprep.mubr.f32.mxu0 0.0
    %470 = vmatmul.mubr.f32.gmra.mrb[0].mxu0 %v367
    %v471 = vpop.f32.mrb[0].mxu0
    %v472 = vadd.f32 %v335, %v471
    %v473 = vpop.f32.mrb[0].mxu0
    %v474 = vadd.f32 %v337, %v473
    %475 = vmatprep.mubr.f32.mxu0 0.0
    %476 = vmatmul.mubr.f32.gmra.mrb[0].mxu0 %v370
    %v477 = vpop.f32.mrb[0].mxu0
    %v478 = vadd.f32 %v341, %v477
    %v479 = vpop.f32.mrb[0].mxu0
    %v480 = vadd.f32 %v343, %v479
    %481 = vmatprep.mubr.f32.mxu0 0.0
    %482 = vmatmul.mubr.f32.gmra.mrb[0].mxu0 %v373
    %v483 = vpop.f32.mrb[0].mxu0
    %v484 = vadd.f32 %v347, %v483
    %v485 = vpop.f32.mrb[0].mxu0
    %v486 = vadd.f32 %v349, %v485
    %487 = vdwg.mxu0
    %v488 = vrot.slane %v137, 2
    %v489 = vrot.slane %v138, 2
    %v490 = vrot.slane %v139, 2
    %v491 = vrot.slane %v140, 2
    %v492 = vrot.slane %v141, 2
    %v493 = vrot.slane %v142, 2
    %v494 = vrot.slane %v143, 2
    %v495 = vrot.slane %v144, 2
    %vm496 = vcmp.lt.s32.totalorder %v178, 6
    %v497 = vsel %vm496, %v494, %v495
    %v498 = vsel %vm496, %v493, %v494
    %v499 = vsel %vm496, %v492, %v493
    %v500 = vsel %vm496, %v491, %v492
    %v501 = vsel %vm496, %v490, %v491
    %v502 = vsel %vm496, %v489, %v490
    %v503 = vsel %vm496, %v488, %v489
    %v504 = vsel %vm496, %v495, %v488
    %s505 = scalar_lea.vmem %s1, 384
    %v506 = vld [vmem:[%s505] sm:$0xff]
    %v507 = vld [vmem:[%s505 + $0x8] sm:$0xff]
    %v508 = vld [vmem:[%s505 + $0x10] sm:$0xff]
    %v509 = vld [vmem:[%s505 + $0x18] sm:$0xff]
    %v510 = vld [vmem:[%s505 + $0x20] sm:$0xff]
    %v511 = vld [vmem:[%s505 + $0x28] sm:$0xff]
    %v512 = vld [vmem:[%s505 + $0x30] sm:$0xff]
    %v513 = vld [vmem:[%s505 + $0x38] sm:$0xff]
    %v514 = vld [vmem:[%s505 + $0x40] sm:$0xff]
    %v515 = vld [vmem:[%s505 + $0x48] sm:$0xff]
    %v516 = vld [vmem:[%s505 + $0x50] sm:$0xff]
    %v517 = vld [vmem:[%s505 + $0x58] sm:$0xff]
    %v518 = vld [vmem:[%s505 + $0x60] sm:$0xff]
    %v519 = vld [vmem:[%s505 + $0x68] sm:$0xff]
    %v520 = vld [vmem:[%s505 + $0x70] sm:$0xff]
    %v521 = vld [vmem:[%s505 + $0x78] sm:$0xff]
    %v522 = vld [vmem:[%s505 + $0x80] sm:$0xff]
    %v523 = vld [vmem:[%s505 + $0x88] sm:$0xff]
    %v524 = vld [vmem:[%s505 + $0x90] sm:$0xff]
    %v525 = vld [vmem:[%s505 + $0x98] sm:$0xff]
    %v526 = vld [vmem:[%s505 + $0xa0] sm:$0xff]
    %v527 = vld [vmem:[%s505 + $0xa8] sm:$0xff]
    %v528 = vld [vmem:[%s505 + $0xb0] sm:$0xff]
    %v529 = vld [vmem:[%s505 + $0xb8] sm:$0xff]
    %v531 = vsel %vm213, %v503, 0
    %v534 = vsel %vm213, %v502, 0
    %v537 = vsel %vm213, %v501, 0
    %v540 = vsel %vm213, %v500, 0
    %v543 = vsel %vm213, %v499, 0
    %v546 = vsel %vm213, %v498, 0
    %v549 = vsel %vm213, %v497, 0
    %v552 = vsel %vm213, %v504, 0
    %554 = vmatprep.subr.mxu0 %v507
    %555 = vmatpush1.msra.mxu0 %v506
    %556 = vmatprep.subr.mxu0 %v509
    %557 = vmatpush1.msra.mxu0 %v508
    %558 = vmatprep.subr.mxu0 %v511
    %559 = vmatpush1.msra.mxu0 %v510
    %560 = vmatprep.subr.mxu0 %v513
    %561 = vmatpush1.msra.mxu0 %v512
    %562 = vmatprep.subr.mxu0 %v515
    %563 = vmatpush1.msra.mxu0 %v514
    %564 = vmatprep.subr.mxu0 %v517
    %565 = vmatpush1.msra.mxu0 %v516
    %566 = vmatprep.subr.mxu0 %v519
    %567 = vmatpush1.msra.mxu0 %v518
    %568 = vmatprep.subr.mxu0 %v521
    %569 = vmatpush1.msra.mxu0 %v520
    %570 = vmatprep.subr.mxu0 %v523
    %571 = vmatpush1.msra.mxu0 %v522
    %572 = vmatprep.subr.mxu0 %v525
    %573 = vmatpush1.msra.mxu0 %v524
    %574 = vmatprep.subr.mxu0 %v527
    %575 = vmatpush1.msra.mxu0 %v526
    %576 = vmatprep.subr.mxu0 %v529
    %577 = vmatpush1.msra.mxu0 %v528
    %578 = vmatprep.subr.mxu0 0.0
    %579 = vmatpush1.msra.mxu0 0.0
    %580 = vmatprep.subr.mxu0 0.0
    %581 = vmatpush1.msra.mxu0 0.0
    %582 = vmatprep.subr.mxu0 0.0
    %583 = vmatpush1.msra.mxu0 0.0
    %584 = vmatprep.subr.mxu0 0.0
    %585 = vmatpush1.msra.mxu0 0.0
    %586 = vmatprep.subr.mxu0 0.0
    %587 = vmatpush1.msra.mxu0 0.0
    %588 = vmatprep.subr.mxu0 0.0
    %589 = vmatpush1.msra.mxu0 0.0
    %590 = vmatprep.subr.mxu0 0.0
    %591 = vmatpush1.msra.mxu0 0.0
    %592 = vmatprep.subr.mxu0 0.0
    %593 = vmatpush1.msra.mxu0 0.0
    %594 = vmatprep.subr.mxu0 0.0
    %595 = vmatpush1.msra.mxu0 0.0
    %596 = vmatprep.subr.mxu0 0.0
    %597 = vmatpush1.msra.mxu0 0.0
    %598 = vmatprep.subr.mxu0 0.0
    %599 = vmatpush1.msra.mxu0 0.0
    %600 = vmatprep.subr.mxu0 0.0
    %601 = vmatpush1.msra.mxu0 0.0
    %602 = vmatprep.subr.mxu0 0.0
    %603 = vmatpush1.msra.mxu0 0.0
    %604 = vmatprep.subr.mxu0 0.0
    %605 = vmatpush1.msra.mxu0 0.0
    %606 = vmatprep.subr.mxu0 0.0
    %607 = vmatpush1.msra.mxu0 0.0
    %608 = vmatprep.subr.mxu0 0.0
    %609 = vmatpush1.msra.mxu0 0.0
    %610 = vmatprep.subr.mxu0 0.0
    %611 = vmatpush1.msra.mxu0 0.0
    %612 = vmatprep.subr.mxu0 0.0
    %613 = vmatpush1.msra.mxu0 0.0
    %614 = vmatprep.subr.mxu0 0.0
    %615 = vmatpush1.msra.mxu0 0.0
    %616 = vmatprep.subr.mxu0 0.0
    %617 = vmatpush1.msra.mxu0 0.0
    %618 = vmatprep.mubr.f32.mxu0 0.0
    %619 = vmatmul.mubr.f32.gmra.mrb[0].mxu0 %v531
    %v620 = vpop.f32.mrb[0].mxu0
    %v621 = vadd.f32 0.0, %v620
    %v622 = vpop.f32.mrb[0].mxu0
    %v623 = vadd.f32 0.0, %v622
    %624 = vmatprep.mubr.f32.mxu0 0.0
    %625 = vmatmul.mubr.f32.gmra.mrb[0].mxu0 %v534
    %v626 = vpop.f32.mrb[0].mxu0
    %v627 = vadd.f32 0.0, %v626
    %v628 = vpop.f32.mrb[0].mxu0
    %v629 = vadd.f32 0.0, %v628
    %630 = vmatprep.mubr.f32.mxu0 0.0
    %631 = vmatmul.mubr.f32.gmra.mrb[0].mxu0 %v537
    %v632 = vpop.f32.mrb[0].mxu0
    %v633 = vadd.f32 0.0, %v632
    %v634 = vpop.f32.mrb[0].mxu0
    %v635 = vadd.f32 0.0, %v634
    %636 = vmatprep.mubr.f32.mxu0 0.0
    %637 = vmatmul.mubr.f32.gmra.mrb[0].mxu0 %v540
    %v638 = vpop.f32.mrb[0].mxu0
    %v639 = vadd.f32 0.0, %v638
    %v640 = vpop.f32.mrb[0].mxu0
    %v641 = vadd.f32 0.0, %v640
    %642 = vmatprep.mubr.f32.mxu0 0.0
    %643 = vmatmul.mubr.f32.gmra.mrb[0].mxu0 %v543
    %v644 = vpop.f32.mrb[0].mxu0
    %v645 = vadd.f32 0.0, %v644
    %v646 = vpop.f32.mrb[0].mxu0
    %v647 = vadd.f32 0.0, %v646
    %648 = vmatprep.mubr.f32.mxu0 0.0
    %649 = vmatmul.mubr.f32.gmra.mrb[0].mxu0 %v546
    %v650 = vpop.f32.mrb[0].mxu0
    %v651 = vadd.f32 0.0, %v650
    %v652 = vpop.f32.mrb[0].mxu0
    %v653 = vadd.f32 0.0, %v652
    %654 = vmatprep.mubr.f32.mxu0 0.0
    %655 = vmatmul.mubr.f32.gmra.mrb[0].mxu0 %v549
    %v656 = vpop.f32.mrb[0].mxu0
    %v657 = vadd.f32 0.0, %v656
    %v658 = vpop.f32.mrb[0].mxu0
    %v659 = vadd.f32 0.0, %v658
    %660 = vmatprep.mubr.f32.mxu0 0.0
    %661 = vmatmul.mubr.f32.gmra.mrb[0].mxu0 %v552
    %v662 = vpop.f32.mrb[0].mxu0
    %v663 = vadd.f32 0.0, %v662
    %v664 = vpop.f32.mrb[0].mxu0
    %v665 = vadd.f32 0.0, %v664
    %666 = vdwg.mxu0
    %v667 = vadd.f32 %v442, %v621
    %v668 = vadd.f32 %v444, %v623
    %v669 = vadd.f32 %v448, %v627
    %v670 = vadd.f32 %v450, %v629
    %v671 = vadd.f32 %v454, %v633
    %v672 = vadd.f32 %v456, %v635
    %v673 = vadd.f32 %v460, %v639
    %v674 = vadd.f32 %v462, %v641
    %v675 = vadd.f32 %v466, %v645
    %v676 = vadd.f32 %v468, %v647
    %v677 = vadd.f32 %v472, %v651
    %v678 = vadd.f32 %v474, %v653
    %v679 = vadd.f32 %v478, %v657
    %v680 = vadd.f32 %v480, %v659
    %v681 = vadd.f32 %v484, %v663
    %v682 = vadd.f32 %v486, %v665
    %v683 = vrot.slane %v137, 3
    %v684 = vrot.slane %v138, 3
    %v685 = vrot.slane %v139, 3
    %v686 = vrot.slane %v140, 3
    %v687 = vrot.slane %v141, 3
    %v688 = vrot.slane %v142, 3
    %v689 = vrot.slane %v143, 3
    %v690 = vrot.slane %v144, 3
    %vm691 = vcmp.lt.s32.totalorder %v178, 5
    %v692 = vsel %vm691, %v689, %v690
    %v693 = vsel %vm691, %v688, %v689
    %v694 = vsel %vm691, %v687, %v688
    %v695 = vsel %vm691, %v686, %v687
    %v696 = vsel %vm691, %v685, %v686
    %v697 = vsel %vm691, %v684, %v685
    %v698 = vsel %vm691, %v683, %v684
    %v699 = vsel %vm691, %v690, %v683
    %s700 = scalar_lea.vmem %s1, 576
    %v701 = vld [vmem:[%s700] sm:$0xff]
    %v702 = vld [vmem:[%s700 + $0x8] sm:$0xff]
    %v703 = vld [vmem:[%s700 + $0x10] sm:$0xff]
    %v704 = vld [vmem:[%s700 + $0x18] sm:$0xff]
    %v705 = vld [vmem:[%s700 + $0x20] sm:$0xff]
    %v706 = vld [vmem:[%s700 + $0x28] sm:$0xff]
    %v707 = vld [vmem:[%s700 + $0x30] sm:$0xff]
    %v708 = vld [vmem:[%s700 + $0x38] sm:$0xff]
    %v709 = vld [vmem:[%s700 + $0x40] sm:$0xff]
    %v710 = vld [vmem:[%s700 + $0x48] sm:$0xff]
    %v711 = vld [vmem:[%s700 + $0x50] sm:$0xff]
    %v712 = vld [vmem:[%s700 + $0x58] sm:$0xff]
    %v713 = vld [vmem:[%s700 + $0x60] sm:$0xff]
    %v714 = vld [vmem:[%s700 + $0x68] sm:$0xff]
    %v715 = vld [vmem:[%s700 + $0x70] sm:$0xff]
    %v716 = vld [vmem:[%s700 + $0x78] sm:$0xff]
    %v717 = vld [vmem:[%s700 + $0x80] sm:$0xff]
    %v718 = vld [vmem:[%s700 + $0x88] sm:$0xff]
    %v719 = vld [vmem:[%s700 + $0x90] sm:$0xff]
    %v720 = vld [vmem:[%s700 + $0x98] sm:$0xff]
    %v721 = vld [vmem:[%s700 + $0xa0] sm:$0xff]
    %v722 = vld [vmem:[%s700 + $0xa8] sm:$0xff]
    %v723 = vld [vmem:[%s700 + $0xb0] sm:$0xff]
    %v724 = vld [vmem:[%s700 + $0xb8] sm:$0xff]
    %v726 = vsel %vm213, %v698, 0
    %v729 = vsel %vm213, %v697, 0
    %v732 = vsel %vm213, %v696, 0
    %v735 = vsel %vm213, %v695, 0
    %v738 = vsel %vm213, %v694, 0
    %v741 = vsel %vm213, %v693, 0
    %v744 = vsel %vm213, %v692, 0
    %v747 = vsel %vm213, %v699, 0
    %749 = vmatprep.subr.mxu0 %v702
    %750 = vmatpush1.msra.mxu0 %v701
    %751 = vmatprep.subr.mxu0 %v704
    %752 = vmatpush1.msra.mxu0 %v703
    %753 = vmatprep.subr.mxu0 %v706
    %754 = vmatpush1.msra.mxu0 %v705
    %755 = vmatprep.subr.mxu0 %v708
    %756 = vmatpush1.msra.mxu0 %v707
    %757 = vmatprep.subr.mxu0 %v710
    %758 = vmatpush1.msra.mxu0 %v709
    %759 = vmatprep.subr.mxu0 %v712
    %760 = vmatpush1.msra.mxu0 %v711
    %761 = vmatprep.subr.mxu0 %v714
    %762 = vmatpush1.msra.mxu0 %v713
    %763 = vmatprep.subr.mxu0 %v716
    %764 = vmatpush1.msra.mxu0 %v715
    %765 = vmatprep.subr.mxu0 %v718
    %766 = vmatpush1.msra.mxu0 %v717
    %767 = vmatprep.subr.mxu0 %v720
    %768 = vmatpush1.msra.mxu0 %v719
    %769 = vmatprep.subr.mxu0 %v722
    %770 = vmatpush1.msra.mxu0 %v721
    %771 = vmatprep.subr.mxu0 %v724
    %772 = vmatpush1.msra.mxu0 %v723
    %773 = vmatprep.subr.mxu0 0.0
    %774 = vmatpush1.msra.mxu0 0.0
    %775 = vmatprep.subr.mxu0 0.0
    %776 = vmatpush1.msra.mxu0 0.0
    %777 = vmatprep.subr.mxu0 0.0
    %778 = vmatpush1.msra.mxu0 0.0
    %779 = vmatprep.subr.mxu0 0.0
    %780 = vmatpush1.msra.mxu0 0.0
    %781 = vmatprep.subr.mxu0 0.0
    %782 = vmatpush1.msra.mxu0 0.0
    %783 = vmatprep.subr.mxu0 0.0
    %784 = vmatpush1.msra.mxu0 0.0
    %785 = vmatprep.subr.mxu0 0.0
    %786 = vmatpush1.msra.mxu0 0.0
    %787 = vmatprep.subr.mxu0 0.0
    %788 = vmatpush1.msra.mxu0 0.0
    %789 = vmatprep.subr.mxu0 0.0
    %790 = vmatpush1.msra.mxu0 0.0
    %791 = vmatprep.subr.mxu0 0.0
    %792 = vmatpush1.msra.mxu0 0.0
    %793 = vmatprep.subr.mxu0 0.0
    %794 = vmatpush1.msra.mxu0 0.0
    %795 = vmatprep.subr.mxu0 0.0
    %796 = vmatpush1.msra.mxu0 0.0
    %797 = vmatprep.subr.mxu0 0.0
    %798 = vmatpush1.msra.mxu0 0.0
    %799 = vmatprep.subr.mxu0 0.0
    %800 = vmatpush1.msra.mxu0 0.0
    %801 = vmatprep.subr.mxu0 0.0
    %802 = vmatpush1.msra.mxu0 0.0
    %803 = vmatprep.subr.mxu0 0.0
    %804 = vmatpush1.msra.mxu0 0.0
    %805 = vmatprep.subr.mxu0 0.0
    %806 = vmatpush1.msra.mxu0 0.0
    %807 = vmatprep.subr.mxu0 0.0
    %808 = vmatpush1.msra.mxu0 0.0
    %809 = vmatprep.subr.mxu0 0.0
    %810 = vmatpush1.msra.mxu0 0.0
    %811 = vmatprep.subr.mxu0 0.0
    %812 = vmatpush1.msra.mxu0 0.0
    %813 = vmatprep.mubr.f32.mxu0 0.0
    %814 = vmatmul.mubr.f32.gmra.mrb[0].mxu0 %v726
    %v815 = vpop.f32.mrb[0].mxu0
    %v816 = vadd.f32 0.0, %v815
    %v817 = vpop.f32.mrb[0].mxu0
    %v818 = vadd.f32 0.0, %v817
    %819 = vmatprep.mubr.f32.mxu0 0.0
    %820 = vmatmul.mubr.f32.gmra.mrb[0].mxu0 %v729
    %v821 = vpop.f32.mrb[0].mxu0
    %v822 = vadd.f32 0.0, %v821
    %v823 = vpop.f32.mrb[0].mxu0
    %v824 = vadd.f32 0.0, %v823
    %825 = vmatprep.mubr.f32.mxu0 0.0
    %826 = vmatmul.mubr.f32.gmra.mrb[0].mxu0 %v732
    %v827 = vpop.f32.mrb[0].mxu0
    %v828 = vadd.f32 0.0, %v827
    %v829 = vpop.f32.mrb[0].mxu0
    %v830 = vadd.f32 0.0, %v829
    %831 = vmatprep.mubr.f32.mxu0 0.0
    %832 = vmatmul.mubr.f32.gmra.mrb[0].mxu0 %v735
    %v833 = vpop.f32.mrb[0].mxu0
    %v834 = vadd.f32 0.0, %v833
    %v835 = vpop.f32.mrb[0].mxu0
    %v836 = vadd.f32 0.0, %v835
    %837 = vmatprep.mubr.f32.mxu0 0.0
    %838 = vmatmul.mubr.f32.gmra.mrb[0].mxu0 %v738
    %v839 = vpop.f32.mrb[0].mxu0
    %v840 = vadd.f32 0.0, %v839
    %v841 = vpop.f32.mrb[0].mxu0
    %v842 = vadd.f32 0.0, %v841
    %843 = vmatprep.mubr.f32.mxu0 0.0
    %844 = vmatmul.mubr.f32.gmra.mrb[0].mxu0 %v741
    %v845 = vpop.f32.mrb[0].mxu0
    %v846 = vadd.f32 0.0, %v845
    %v847 = vpop.f32.mrb[0].mxu0
    %v848 = vadd.f32 0.0, %v847
    %849 = vmatprep.mubr.f32.mxu0 0.0
    %850 = vmatmul.mubr.f32.gmra.mrb[0].mxu0 %v744
    %v851 = vpop.f32.mrb[0].mxu0
    %v852 = vadd.f32 0.0, %v851
    %v853 = vpop.f32.mrb[0].mxu0
    %v854 = vadd.f32 0.0, %v853
    %855 = vmatprep.mubr.f32.mxu0 0.0
    %856 = vmatmul.mubr.f32.gmra.mrb[0].mxu0 %v747
    %v857 = vpop.f32.mrb[0].mxu0
    %v858 = vadd.f32 0.0, %v857
    %v859 = vpop.f32.mrb[0].mxu0
    %v860 = vadd.f32 0.0, %v859
    %861 = vdwg.mxu0
    %v862 = vadd.f32 %v667, %v816
    %v863 = vadd.f32 %v668, %v818
    %v864 = vadd.f32 %v669, %v822
    %v865 = vadd.f32 %v670, %v824
    %v866 = vadd.f32 %v671, %v828
    %v867 = vadd.f32 %v672, %v830
    %v868 = vadd.f32 %v673, %v834
    %v869 = vadd.f32 %v674, %v836
    %v870 = vadd.f32 %v675, %v840
    %v871 = vadd.f32 %v676, %v842
    %v872 = vadd.f32 %v677, %v846
    %v873 = vadd.f32 %v678, %v848
    %v874 = vadd.f32 %v679, %v852
    %v875 = vadd.f32 %v680, %v854
    %v876 = vadd.f32 %v681, %v858
    %v877 = vadd.f32 %v682, %v860
    %v878 = vrot.slane %v137, 4
    %v879 = vrot.slane %v138, 4
    %v880 = vrot.slane %v139, 4
    %v881 = vrot.slane %v140, 4
    %v882 = vrot.slane %v141, 4
    %v883 = vrot.slane %v142, 4
    %v884 = vrot.slane %v143, 4
    %v885 = vrot.slane %v144, 4
    %vm886 = vcmp.lt.s32.totalorder %v178, 4
    %v887 = vsel %vm886, %v884, %v885
    %v888 = vsel %vm886, %v883, %v884
    %v889 = vsel %vm886, %v882, %v883
    %v890 = vsel %vm886, %v881, %v882
    %v891 = vsel %vm886, %v880, %v881
    %v892 = vsel %vm886, %v879, %v880
    %v893 = vsel %vm886, %v878, %v879
    %v894 = vsel %vm886, %v885, %v878
    %s895 = scalar_lea.vmem %s1, 768
    %v896 = vld [vmem:[%s895] sm:$0xff]
    %v897 = vld [vmem:[%s895 + $0x8] sm:$0xff]
    %v898 = vld [vmem:[%s895 + $0x10] sm:$0xff]
    %v899 = vld [vmem:[%s895 + $0x18] sm:$0xff]
    %v900 = vld [vmem:[%s895 + $0x20] sm:$0xff]
    %v901 = vld [vmem:[%s895 + $0x28] sm:$0xff]
    %v902 = vld [vmem:[%s895 + $0x30] sm:$0xff]
    %v903 = vld [vmem:[%s895 + $0x38] sm:$0xff]
    %v904 = vld [vmem:[%s895 + $0x40] sm:$0xff]
    %v905 = vld [vmem:[%s895 + $0x48] sm:$0xff]
    %v906 = vld [vmem:[%s895 + $0x50] sm:$0xff]
    %v907 = vld [vmem:[%s895 + $0x58] sm:$0xff]
    %v908 = vld [vmem:[%s895 + $0x60] sm:$0xff]
    %v909 = vld [vmem:[%s895 + $0x68] sm:$0xff]
    %v910 = vld [vmem:[%s895 + $0x70] sm:$0xff]
    %v911 = vld [vmem:[%s895 + $0x78] sm:$0xff]
    %v912 = vld [vmem:[%s895 + $0x80] sm:$0xff]
    %v913 = vld [vmem:[%s895 + $0x88] sm:$0xff]
    %v914 = vld [vmem:[%s895 + $0x90] sm:$0xff]
    %v915 = vld [vmem:[%s895 + $0x98] sm:$0xff]
    %v916 = vld [vmem:[%s895 + $0xa0] sm:$0xff]
    %v917 = vld [vmem:[%s895 + $0xa8] sm:$0xff]
    %v918 = vld [vmem:[%s895 + $0xb0] sm:$0xff]
    %v919 = vld [vmem:[%s895 + $0xb8] sm:$0xff]
    %v921 = vsel %vm213, %v893, 0
    %v924 = vsel %vm213, %v892, 0
    %v927 = vsel %vm213, %v891, 0
    %v930 = vsel %vm213, %v890, 0
    %v933 = vsel %vm213, %v889, 0
    %v936 = vsel %vm213, %v888, 0
    %v939 = vsel %vm213, %v887, 0
    %v942 = vsel %vm213, %v894, 0
    %944 = vmatprep.subr.mxu0 %v897
    %945 = vmatpush1.msra.mxu0 %v896
    %946 = vmatprep.subr.mxu0 %v899
    %947 = vmatpush1.msra.mxu0 %v898
    %948 = vmatprep.subr.mxu0 %v901
    %949 = vmatpush1.msra.mxu0 %v900
    %950 = vmatprep.subr.mxu0 %v903
    %951 = vmatpush1.msra.mxu0 %v902
    %952 = vmatprep.subr.mxu0 %v905
    %953 = vmatpush1.msra.mxu0 %v904
    %954 = vmatprep.subr.mxu0 %v907
    %955 = vmatpush1.msra.mxu0 %v906
    %956 = vmatprep.subr.mxu0 %v909
    %957 = vmatpush1.msra.mxu0 %v908
    %958 = vmatprep.subr.mxu0 %v911
    %959 = vmatpush1.msra.mxu0 %v910
    %960 = vmatprep.subr.mxu0 %v913
    %961 = vmatpush1.msra.mxu0 %v912
    %962 = vmatprep.subr.mxu0 %v915
    %963 = vmatpush1.msra.mxu0 %v914
    %964 = vmatprep.subr.mxu0 %v917
    %965 = vmatpush1.msra.mxu0 %v916
    %966 = vmatprep.subr.mxu0 %v919
    %967 = vmatpush1.msra.mxu0 %v918
    %968 = vmatprep.subr.mxu0 0.0
    %969 = vmatpush1.msra.mxu0 0.0
    %970 = vmatprep.subr.mxu0 0.0
    %971 = vmatpush1.msra.mxu0 0.0
    %972 = vmatprep.subr.mxu0 0.0
    %973 = vmatpush1.msra.mxu0 0.0
    %974 = vmatprep.subr.mxu0 0.0
    %975 = vmatpush1.msra.mxu0 0.0
    %976 = vmatprep.subr.mxu0 0.0
    %977 = vmatpush1.msra.mxu0 0.0
    %978 = vmatprep.subr.mxu0 0.0
    %979 = vmatpush1.msra.mxu0 0.0
    %980 = vmatprep.subr.mxu0 0.0
    %981 = vmatpush1.msra.mxu0 0.0
    %982 = vmatprep.subr.mxu0 0.0
    %983 = vmatpush1.msra.mxu0 0.0
    %984 = vmatprep.subr.mxu0 0.0
    %985 = vmatpush1.msra.mxu0 0.0
    %986 = vmatprep.subr.mxu0 0.0
    %987 = vmatpush1.msra.mxu0 0.0
    %988 = vmatprep.subr.mxu0 0.0
    %989 = vmatpush1.msra.mxu0 0.0
    %990 = vmatprep.subr.mxu0 0.0
    %991 = vmatpush1.msra.mxu0 0.0
    %992 = vmatprep.subr.mxu0 0.0
    %993 = vmatpush1.msra.mxu0 0.0
    %994 = vmatprep.subr.mxu0 0.0
    %995 = vmatpush1.msra.mxu0 0.0
    %996 = vmatprep.subr.mxu0 0.0
    %997 = vmatpush1.msra.mxu0 0.0
    %998 = vmatprep.subr.mxu0 0.0
    %999 = vmatpush1.msra.mxu0 0.0
    %1000 = vmatprep.subr.mxu0 0.0
    %1001 = vmatpush1.msra.mxu0 0.0
    %1002 = vmatprep.subr.mxu0 0.0
    %1003 = vmatpush1.msra.mxu0 0.0
    %1004 = vmatprep.subr.mxu0 0.0
    %1005 = vmatpush1.msra.mxu0 0.0
    %1006 = vmatprep.subr.mxu0 0.0
    %1007 = vmatpush1.msra.mxu0 0.0
    %1008 = vmatprep.mubr.f32.mxu0 0.0
    %1009 = vmatmul.mubr.f32.gmra.mrb[0].mxu0 %v921
    %v1010 = vpop.f32.mrb[0].mxu0
    %v1011 = vadd.f32 0.0, %v1010
    %v1012 = vpop.f32.mrb[0].mxu0
    %v1013 = vadd.f32 0.0, %v1012
    %1014 = vmatprep.mubr.f32.mxu0 0.0
    %1015 = vmatmul.mubr.f32.gmra.mrb[0].mxu0 %v924
    %v1016 = vpop.f32.mrb[0].mxu0
    %v1017 = vadd.f32 0.0, %v1016
    %v1018 = vpop.f32.mrb[0].mxu0
    %v1019 = vadd.f32 0.0, %v1018
    %1020 = vmatprep.mubr.f32.mxu0 0.0
    %1021 = vmatmul.mubr.f32.gmra.mrb[0].mxu0 %v927
    %v1022 = vpop.f32.mrb[0].mxu0
    %v1023 = vadd.f32 0.0, %v1022
    %v1024 = vpop.f32.mrb[0].mxu0
    %v1025 = vadd.f32 0.0, %v1024
    %1026 = vmatprep.mubr.f32.mxu0 0.0
    %1027 = vmatmul.mubr.f32.gmra.mrb[0].mxu0 %v930
    %v1028 = vpop.f32.mrb[0].mxu0
    %v1029 = vadd.f32 0.0, %v1028
    %v1030 = vpop.f32.mrb[0].mxu0
    %v1031 = vadd.f32 0.0, %v1030
    %1032 = vmatprep.mubr.f32.mxu0 0.0
    %1033 = vmatmul.mubr.f32.gmra.mrb[0].mxu0 %v933
    %v1034 = vpop.f32.mrb[0].mxu0
    %v1035 = vadd.f32 0.0, %v1034
    %v1036 = vpop.f32.mrb[0].mxu0
    %v1037 = vadd.f32 0.0, %v1036
    %1038 = vmatprep.mubr.f32.mxu0 0.0
    %1039 = vmatmul.mubr.f32.gmra.mrb[0].mxu0 %v936
    %v1040 = vpop.f32.mrb[0].mxu0
    %v1041 = vadd.f32 0.0, %v1040
    %v1042 = vpop.f32.mrb[0].mxu0
    %v1043 = vadd.f32 0.0, %v1042
    %1044 = vmatprep.mubr.f32.mxu0 0.0
    %1045 = vmatmul.mubr.f32.gmra.mrb[0].mxu0 %v939
    %v1046 = vpop.f32.mrb[0].mxu0
    %v1047 = vadd.f32 0.0, %v1046
    %v1048 = vpop.f32.mrb[0].mxu0
    %v1049 = vadd.f32 0.0, %v1048
    %1050 = vmatprep.mubr.f32.mxu0 0.0
    %1051 = vmatmul.mubr.f32.gmra.mrb[0].mxu0 %v942
    %v1052 = vpop.f32.mrb[0].mxu0
    %v1053 = vadd.f32 0.0, %v1052
    %v1054 = vpop.f32.mrb[0].mxu0
    %v1055 = vadd.f32 0.0, %v1054
    %1056 = vdwg.mxu0
    %v1057 = vadd.f32 %v862, %v1011
    %v1058 = vadd.f32 %v863, %v1013
    %v1059 = vadd.f32 %v864, %v1017
    %v1060 = vadd.f32 %v865, %v1019
    %v1061 = vadd.f32 %v866, %v1023
    %v1062 = vadd.f32 %v867, %v1025
    %v1063 = vadd.f32 %v868, %v1029
    %v1064 = vadd.f32 %v869, %v1031
    %v1065 = vadd.f32 %v870, %v1035
    %v1066 = vadd.f32 %v871, %v1037
    %v1067 = vadd.f32 %v872, %v1041
    %v1068 = vadd.f32 %v873, %v1043
    %v1069 = vadd.f32 %v874, %v1047
    %v1070 = vadd.f32 %v875, %v1049
    %v1071 = vadd.f32 %v876, %v1053
    %v1072 = vadd.f32 %v877, %v1055
    %v1073 = vld [vmem:[%s2] sm:$0x1]
    %v1075 = vlaneseq
    %v1076 = vshrl.u32 %v1075, 7
    %v1077 = vsub.s32 0, %v1076
    %v1078 = vrot.slane %v1073, %v1077
    %v1080 = vadd.f32 %v1057, %v1078
    %v1081 = vadd.f32 %v1059, %v1078
    %v1082 = vadd.f32 %v1061, %v1078
    %v1083 = vadd.f32 %v1063, %v1078
    %v1084 = vadd.f32 %v1065, %v1078
    %v1085 = vadd.f32 %v1067, %v1078
    %v1086 = vadd.f32 %v1069, %v1078
    %v1087 = vadd.f32 %v1071, %v1078
    %v1088 = vmax.f32 %v1080, 0.0
    %v1089 = vmax.f32 %v1081, 0.0
    %v1090 = vmax.f32 %v1082, 0.0
    %v1091 = vmax.f32 %v1083, 0.0
    %v1092 = vmax.f32 %v1084, 0.0
    %v1093 = vmax.f32 %v1085, 0.0
    %v1094 = vmax.f32 %v1086, 0.0
    %v1095 = vmax.f32 %v1087, 0.0
    %1096 = vrot.lane.b32.xlu0 %v1078, 84
    %v1097 = vpop.permute.xlu0 %1096
    %v1099 = vadd.f32 %v1057, %v1097
    %v1100 = vadd.f32 %v1058, %v1097
    %v1101 = vadd.f32 %v1059, %v1097
    %v1102 = vadd.f32 %v1060, %v1097
    %v1103 = vadd.f32 %v1061, %v1097
    %v1104 = vadd.f32 %v1062, %v1097
    %v1105 = vadd.f32 %v1063, %v1097
    %v1106 = vadd.f32 %v1064, %v1097
    %v1107 = vadd.f32 %v1065, %v1097
    %v1108 = vadd.f32 %v1066, %v1097
    %v1109 = vadd.f32 %v1067, %v1097
    %v1110 = vadd.f32 %v1068, %v1097
    %v1111 = vadd.f32 %v1069, %v1097
    %v1112 = vadd.f32 %v1070, %v1097
    %v1113 = vadd.f32 %v1071, %v1097
    %v1114 = vadd.f32 %v1072, %v1097
    %v1115 = vmax.f32 %v1099, 0.0
    %v1116 = vmax.f32 %v1100, 0.0
    %v1117 = vmax.f32 %v1101, 0.0
    %v1118 = vmax.f32 %v1102, 0.0
    %v1119 = vmax.f32 %v1103, 0.0
    %v1120 = vmax.f32 %v1104, 0.0
    %v1121 = vmax.f32 %v1105, 0.0
    %v1122 = vmax.f32 %v1106, 0.0
    %v1123 = vmax.f32 %v1107, 0.0
    %v1124 = vmax.f32 %v1108, 0.0
    %v1125 = vmax.f32 %v1109, 0.0
    %v1126 = vmax.f32 %v1110, 0.0
    %v1127 = vmax.f32 %v1111, 0.0
    %v1128 = vmax.f32 %v1112, 0.0
    %v1129 = vmax.f32 %v1113, 0.0
    %v1130 = vmax.f32 %v1114, 0.0
    %1147 = vrot.lane.b32.xlu0 %v1115, 44
    %v1148 = vpop.permute.xlu0 %1147
    %1149 = vrot.lane.b32.xlu0 %v1116, 44
    %v1150 = vpop.permute.xlu0 %1149
    %1151 = vrot.lane.b32.xlu0 %v1117, 44
    %v1152 = vpop.permute.xlu0 %1151
    %1153 = vrot.lane.b32.xlu0 %v1118, 44
    %v1154 = vpop.permute.xlu0 %1153
    %1155 = vrot.lane.b32.xlu0 %v1119, 44
    %v1156 = vpop.permute.xlu0 %1155
    %1157 = vrot.lane.b32.xlu0 %v1120, 44
    %v1158 = vpop.permute.xlu0 %1157
    %1159 = vrot.lane.b32.xlu0 %v1121, 44
    %v1160 = vpop.permute.xlu0 %1159
    %1161 = vrot.lane.b32.xlu0 %v1122, 44
    %v1162 = vpop.permute.xlu0 %1161
    %1163 = vrot.lane.b32.xlu0 %v1123, 44
    %v1164 = vpop.permute.xlu0 %1163
    %1165 = vrot.lane.b32.xlu0 %v1124, 44
    %v1166 = vpop.permute.xlu0 %1165
    %1167 = vrot.lane.b32.xlu0 %v1125, 44
    %v1168 = vpop.permute.xlu0 %1167
    %1169 = vrot.lane.b32.xlu0 %v1126, 44
    %v1170 = vpop.permute.xlu0 %1169
    %1171 = vrot.lane.b32.xlu0 %v1127, 44
    %v1172 = vpop.permute.xlu0 %1171
    %1173 = vrot.lane.b32.xlu0 %v1128, 44
    %v1174 = vpop.permute.xlu0 %1173
    %1175 = vrot.lane.b32.xlu0 %v1129, 44
    %v1176 = vpop.permute.xlu0 %1175
    %1177 = vrot.lane.b32.xlu0 %v1130, 44
    %v1178 = vpop.permute.xlu0 %1177
    %vm1179 = vcmask 359424
    %v1180 = vsel %vm1179, %v1148, %v1150
    %v1181 = vsel %vm1179, %v1152, %v1154
    %v1182 = vsel %vm1179, %v1156, %v1158
    %v1183 = vsel %vm1179, %v1160, %v1162
    %v1184 = vsel %vm1179, %v1164, %v1166
    %v1185 = vsel %vm1179, %v1168, %v1170
    %v1186 = vsel %vm1179, %v1172, %v1174
    %v1187 = vsel %vm1179, %v1176, %v1178
    %v1196 = vmax.f32 %v1088, %v1180
    %v1197 = vmax.f32 %v1089, %v1181
    %v1198 = vmax.f32 %v1090, %v1182
    %v1199 = vmax.f32 %v1091, %v1183
    %v1200 = vmax.f32 %v1092, %v1184
    %v1201 = vmax.f32 %v1093, %v1185
    %v1202 = vmax.f32 %v1094, %v1186
    %v1203 = vmax.f32 %v1095, %v1187
    %v1204 = vrot.slane %v1196, 1
    %v1205 = vrot.slane %v1197, 1
    %v1206 = vrot.slane %v1198, 1
    %v1207 = vrot.slane %v1199, 1
    %v1208 = vrot.slane %v1200, 1
    %v1209 = vrot.slane %v1201, 1
    %v1210 = vrot.slane %v1202, 1
    %v1211 = vrot.slane %v1203, 1
    %v1212 = vsel %vm179, %v1210, %v1211
    %v1213 = vsel %vm179, %v1209, %v1210
    %v1214 = vsel %vm179, %v1208, %v1209
    %v1215 = vsel %vm179, %v1207, %v1208
    %v1216 = vsel %vm179, %v1206, %v1207
    %v1217 = vsel %vm179, %v1205, %v1206
    %v1218 = vsel %vm179, %v1204, %v1205
    %v1219 = vsel %vm179, %v1211, %v1204
    %v1220 = vmax.f32 %v1196, %v1218
    %v1221 = vmax.f32 %v1197, %v1217
    %v1222 = vmax.f32 %v1198, %v1216
    %v1223 = vmax.f32 %v1199, %v1215
    %v1224 = vmax.f32 %v1200, %v1214
    %v1225 = vmax.f32 %v1201, %v1213
    %v1226 = vmax.f32 %v1202, %v1212
    %v1227 = vmax.f32 %v1203, %v1219
    %v1228 = vld [vmem:[%s3] sm:$0xff]
    %v1229 = vld [vmem:[%s3 + $0x8] sm:$0xff]
    %v1230 = vld [vmem:[%s3 + $0x10] sm:$0xff]
    %v1231 = vld [vmem:[%s3 + $0x18] sm:$0xff]
    %v1232 = vld [vmem:[%s3 + $0x20] sm:$0xff]
    %v1233 = vld [vmem:[%s3 + $0x28] sm:$0xff]
    %v1234 = vld [vmem:[%s3 + $0x30] sm:$0xff]
    %v1235 = vld [vmem:[%s3 + $0x38] sm:$0xff]
    %v1236 = vld [vmem:[%s3 + $0x40] sm:$0xff]
    %v1237 = vld [vmem:[%s3 + $0x48] sm:$0xff]
    %v1238 = vld [vmem:[%s3 + $0x50] sm:$0xff]
    %v1239 = vld [vmem:[%s3 + $0x58] sm:$0xff]
    %v1240 = vld [vmem:[%s3 + $0x60] sm:$0xff]
    %v1241 = vld [vmem:[%s3 + $0x68] sm:$0xff]
    %v1242 = vld [vmem:[%s3 + $0x70] sm:$0xff]
    %v1243 = vld [vmem:[%s3 + $0x78] sm:$0xff]
    %v1244 = vld [vmem:[%s3 + $0x80] sm:$0xff]
    %v1245 = vld [vmem:[%s3 + $0x88] sm:$0xff]
    %v1246 = vld [vmem:[%s3 + $0x90] sm:$0xff]
    %v1247 = vld [vmem:[%s3 + $0x98] sm:$0xff]
    %v1248 = vld [vmem:[%s3 + $0xa0] sm:$0xf]
    %v1249 = vld [vmem:[%s3 + $0xa8] sm:$0xf]
    %v1250 = vrot.slane %v1220, 2
    %v1251 = vrot.slane %v1221, 2
    %v1252 = vrot.slane %v1222, 2
    %v1253 = vrot.slane %v1223, 2
    %v1254 = vrot.slane %v1224, 2
    %v1255 = vrot.slane %v1225, 2
    %v1256 = vrot.slane %v1226, 2
    %v1257 = vrot.slane %v1227, 2
    %v1258 = vsel %vm496, %v1256, %v1257
    %v1259 = vsel %vm496, %v1255, %v1256
    %v1260 = vsel %vm496, %v1254, %v1255
    %v1261 = vsel %vm496, %v1253, %v1254
    %v1262 = vsel %vm496, %v1252, %v1253
    %v1263 = vsel %vm496, %v1251, %v1252
    %v1264 = vsel %vm496, %v1250, %v1251
    %v1265 = vsel %vm496, %v1257, %v1250
    %s1266 = scalar_lea.vmem %s3, 176
    %v1267 = vld [vmem:[%s1266] sm:$0xff]
    %v1268 = vld [vmem:[%s1266 + $0x8] sm:$0xff]
    %v1269 = vld [vmem:[%s1266 + $0x10] sm:$0xff]
    %v1270 = vld [vmem:[%s1266 + $0x18] sm:$0xff]
    %v1271 = vld [vmem:[%s1266 + $0x20] sm:$0xff]
    %v1272 = vld [vmem:[%s1266 + $0x28] sm:$0xff]
    %v1273 = vld [vmem:[%s1266 + $0x30] sm:$0xff]
    %v1274 = vld [vmem:[%s1266 + $0x38] sm:$0xff]
    %v1275 = vld [vmem:[%s1266 + $0x40] sm:$0xff]
    %v1276 = vld [vmem:[%s1266 + $0x48] sm:$0xff]
    %v1277 = vld [vmem:[%s1266 + $0x50] sm:$0xff]
    %v1278 = vld [vmem:[%s1266 + $0x58] sm:$0xff]
    %v1279 = vld [vmem:[%s1266 + $0x60] sm:$0xff]
    %v1280 = vld [vmem:[%s1266 + $0x68] sm:$0xff]
    %v1281 = vld [vmem:[%s1266 + $0x70] sm:$0xff]
    %v1282 = vld [vmem:[%s1266 + $0x78] sm:$0xff]
    %v1283 = vld [vmem:[%s1266 + $0x80] sm:$0xff]
    %v1284 = vld [vmem:[%s1266 + $0x88] sm:$0xff]
    %v1285 = vld [vmem:[%s1266 + $0x90] sm:$0xff]
    %v1286 = vld [vmem:[%s1266 + $0x98] sm:$0xff]
    %v1287 = vld [vmem:[%s1266 + $0xa0] sm:$0xf]
    %v1288 = vld [vmem:[%s1266 + $0xa8] sm:$0xf]
    %vm1289 = vcmask 687104
    %v1291 = vsel %vm1289, %v1264, 0
    %v1294 = vsel %vm1289, %v1263, 0
    %v1297 = vsel %vm1289, %v1262, 0
    %v1300 = vsel %vm1289, %v1261, 0
    %v1303 = vsel %vm1289, %v1260, 0
    %v1306 = vsel %vm1289, %v1259, 0
    %v1309 = vsel %vm1289, %v1258, 0
    %v1312 = vsel %vm1289, %v1265, 0
    %vm1314 = vcmask 1043456
    %v1316 = vsel %vm1314, %v1287, 0
    %v1319 = vsel %vm1314, %v1288, 0
    %1321 = vmatprep.subr.mxu0 %v1268
    %1322 = vmatpush1.msra.mxu0 %v1267
    %1323 = vmatprep.subr.mxu0 %v1270
    %1324 = vmatpush1.msra.mxu0 %v1269
    %1325 = vmatprep.subr.mxu0 %v1272
    %1326 = vmatpush1.msra.mxu0 %v1271
    %1327 = vmatprep.subr.mxu0 %v1274
    %1328 = vmatpush1.msra.mxu0 %v1273
    %1329 = vmatprep.subr.mxu0 %v1276
    %1330 = vmatpush1.msra.mxu0 %v1275
    %1331 = vmatprep.subr.mxu0 %v1278
    %1332 = vmatpush1.msra.mxu0 %v1277
    %1333 = vmatprep.subr.mxu0 %v1280
    %1334 = vmatpush1.msra.mxu0 %v1279
    %1335 = vmatprep.subr.mxu0 %v1282
    %1336 = vmatpush1.msra.mxu0 %v1281
    %1337 = vmatprep.subr.mxu0 %v1284
    %1338 = vmatpush1.msra.mxu0 %v1283
    %1339 = vmatprep.subr.mxu0 %v1286
    %1340 = vmatpush1.msra.mxu0 %v1285
    %1341 = vmatprep.subr.mxu0 %v1319
    %1342 = vmatpush1.msra.mxu0 %v1316
    %1343 = vmatprep.subr.mxu0 0.0
    %1344 = vmatpush1.msra.mxu0 0.0
    %1345 = vmatprep.subr.mxu0 0.0
    %1346 = vmatpush1.msra.mxu0 0.0
    %1347 = vmatprep.subr.mxu0 0.0
    %1348 = vmatpush1.msra.mxu0 0.0
    %1349 = vmatprep.subr.mxu0 0.0
    %1350 = vmatpush1.msra.mxu0 0.0
    %1351 = vmatprep.subr.mxu0 0.0
    %1352 = vmatpush1.msra.mxu0 0.0
    %1353 = vmatprep.subr.mxu0 0.0
    %1354 = vmatpush1.msra.mxu0 0.0
    %1355 = vmatprep.subr.mxu0 0.0
    %1356 = vmatpush1.msra.mxu0 0.0
    %1357 = vmatprep.subr.mxu0 0.0
    %1358 = vmatpush1.msra.mxu0 0.0
    %1359 = vmatprep.subr.mxu0 0.0
    %1360 = vmatpush1.msra.mxu0 0.0
    %1361 = vmatprep.subr.mxu0 0.0
    %1362 = vmatpush1.msra.mxu0 0.0
    %1363 = vmatprep.subr.mxu0 0.0
    %1364 = vmatpush1.msra.mxu0 0.0
    %1365 = vmatprep.subr.mxu0 0.0
    %1366 = vmatpush1.msra.mxu0 0.0
    %1367 = vmatprep.subr.mxu0 0.0
    %1368 = vmatpush1.msra.mxu0 0.0
    %1369 = vmatprep.subr.mxu0 0.0
    %1370 = vmatpush1.msra.mxu0 0.0
    %1371 = vmatprep.subr.mxu0 0.0
    %1372 = vmatpush1.msra.mxu0 0.0
    %1373 = vmatprep.subr.mxu0 0.0
    %1374 = vmatpush1.msra.mxu0 0.0
    %1375 = vmatprep.subr.mxu0 0.0
    %1376 = vmatpush1.msra.mxu0 0.0
    %1377 = vmatprep.subr.mxu0 0.0
    %1378 = vmatpush1.msra.mxu0 0.0
    %1379 = vmatprep.subr.mxu0 0.0
    %1380 = vmatpush1.msra.mxu0 0.0
    %1381 = vmatprep.subr.mxu0 0.0
    %1382 = vmatpush1.msra.mxu0 0.0
    %1383 = vmatprep.subr.mxu0 0.0
    %1384 = vmatpush1.msra.mxu0 0.0
    %1385 = vmatprep.mubr.f32.mxu0 0.0
    %1386 = vmatmul.mubr.f32.gmra.mrb[0].mxu0 %v1291
    %v1387 = vpop.f32.mrb[0].mxu0
    %v1388 = vadd.f32 0.0, %v1387
    %v1389 = vpop.f32.mrb[0].mxu0
    %v1390 = vadd.f32 0.0, %v1389
    %1391 = vmatprep.mubr.f32.mxu0 0.0
    %1392 = vmatmul.mubr.f32.gmra.mrb[0].mxu0 %v1294
    %v1393 = vpop.f32.mrb[0].mxu0
    %v1394 = vadd.f32 0.0, %v1393
    %v1395 = vpop.f32.mrb[0].mxu0
    %v1396 = vadd.f32 0.0, %v1395
    %1397 = vmatprep.mubr.f32.mxu0 0.0
    %1398 = vmatmul.mubr.f32.gmra.mrb[0].mxu0 %v1297
    %v1399 = vpop.f32.mrb[0].mxu0
    %v1400 = vadd.f32 0.0, %v1399
    %v1401 = vpop.f32.mrb[0].mxu0
    %v1402 = vadd.f32 0.0, %v1401
    %1403 = vmatprep.mubr.f32.mxu0 0.0
    %1404 = vmatmul.mubr.f32.gmra.mrb[0].mxu0 %v1300
    %v1405 = vpop.f32.mrb[0].mxu0
    %v1406 = vadd.f32 0.0, %v1405
    %v1407 = vpop.f32.mrb[0].mxu0
    %v1408 = vadd.f32 0.0, %v1407
    %1409 = vmatprep.mubr.f32.mxu0 0.0
    %1410 = vmatmul.mubr.f32.gmra.mrb[0].mxu0 %v1303
    %v1411 = vpop.f32.mrb[0].mxu0
    %v1412 = vadd.f32 0.0, %v1411
    %v1413 = vpop.f32.mrb[0].mxu0
    %v1414 = vadd.f32 0.0, %v1413
    %1415 = vmatprep.mubr.f32.mxu0 0.0
    %1416 = vmatmul.mubr.f32.gmra.mrb[0].mxu0 %v1306
    %v1417 = vpop.f32.mrb[0].mxu0
    %v1418 = vadd.f32 0.0, %v1417
    %v1419 = vpop.f32.mrb[0].mxu0
    %v1420 = vadd.f32 0.0, %v1419
    %1421 = vmatprep.mubr.f32.mxu0 0.0
    %1422 = vmatmul.mubr.f32.gmra.mrb[0].mxu0 %v1309
    %v1423 = vpop.f32.mrb[0].mxu0
    %v1424 = vadd.f32 0.0, %v1423
    %v1425 = vpop.f32.mrb[0].mxu0
    %v1426 = vadd.f32 0.0, %v1425
    %1427 = vmatprep.mubr.f32.mxu0 0.0
    %1428 = vmatmul.mubr.f32.gmra.mrb[0].mxu0 %v1312
    %v1429 = vpop.f32.mrb[0].mxu0
    %v1430 = vadd.f32 0.0, %v1429
    %v1431 = vpop.f32.mrb[0].mxu0
    %v1432 = vadd.f32 0.0, %v1431
    %1433 = vdwg.mxu0
    %v1435 = vsel %vm1289, %v1220, 0
    %v1438 = vsel %vm1289, %v1221, 0
    %v1441 = vsel %vm1289, %v1222, 0
    %v1444 = vsel %vm1289, %v1223, 0
    %v1447 = vsel %vm1289, %v1224, 0
    %v1450 = vsel %vm1289, %v1225, 0
    %v1453 = vsel %vm1289, %v1226, 0
    %v1456 = vsel %vm1289, %v1227, 0
    %v1459 = vsel %vm1314, %v1248, 0
    %v1462 = vsel %vm1314, %v1249, 0
    %1464 = vmatprep.subr.mxu0 %v1229
    %1465 = vmatpush1.msra.mxu0 %v1228
    %1466 = vmatprep.subr.mxu0 %v1231
    %1467 = vmatpush1.msra.mxu0 %v1230
    %1468 = vmatprep.subr.mxu0 %v1233
    %1469 = vmatpush1.msra.mxu0 %v1232
    %1470 = vmatprep.subr.mxu0 %v1235
    %1471 = vmatpush1.msra.mxu0 %v1234
    %1472 = vmatprep.subr.mxu0 %v1237
    %1473 = vmatpush1.msra.mxu0 %v1236
    %1474 = vmatprep.subr.mxu0 %v1239
    %1475 = vmatpush1.msra.mxu0 %v1238
    %1476 = vmatprep.subr.mxu0 %v1241
    %1477 = vmatpush1.msra.mxu0 %v1240
    %1478 = vmatprep.subr.mxu0 %v1243
    %1479 = vmatpush1.msra.mxu0 %v1242
    %1480 = vmatprep.subr.mxu0 %v1245
    %1481 = vmatpush1.msra.mxu0 %v1244
    %1482 = vmatprep.subr.mxu0 %v1247
    %1483 = vmatpush1.msra.mxu0 %v1246
    %1484 = vmatprep.subr.mxu0 %v1462
    %1485 = vmatpush1.msra.mxu0 %v1459
    %1486 = vmatprep.subr.mxu0 0.0
    %1487 = vmatpush1.msra.mxu0 0.0
    %1488 = vmatprep.subr.mxu0 0.0
    %1489 = vmatpush1.msra.mxu0 0.0
    %1490 = vmatprep.subr.mxu0 0.0
    %1491 = vmatpush1.msra.mxu0 0.0
    %1492 = vmatprep.subr.mxu0 0.0
    %1493 = vmatpush1.msra.mxu0 0.0
    %1494 = vmatprep.subr.mxu0 0.0
    %1495 = vmatpush1.msra.mxu0 0.0
    %1496 = vmatprep.subr.mxu0 0.0
    %1497 = vmatpush1.msra.mxu0 0.0
    %1498 = vmatprep.subr.mxu0 0.0
    %1499 = vmatpush1.msra.mxu0 0.0
    %1500 = vmatprep.subr.mxu0 0.0
    %1501 = vmatpush1.msra.mxu0 0.0
    %1502 = vmatprep.subr.mxu0 0.0
    %1503 = vmatpush1.msra.mxu0 0.0
    %1504 = vmatprep.subr.mxu0 0.0
    %1505 = vmatpush1.msra.mxu0 0.0
    %1506 = vmatprep.subr.mxu0 0.0
    %1507 = vmatpush1.msra.mxu0 0.0
    %1508 = vmatprep.subr.mxu0 0.0
    %1509 = vmatpush1.msra.mxu0 0.0
    %1510 = vmatprep.subr.mxu0 0.0
    %1511 = vmatpush1.msra.mxu0 0.0
    %1512 = vmatprep.subr.mxu0 0.0
    %1513 = vmatpush1.msra.mxu0 0.0
    %1514 = vmatprep.subr.mxu0 0.0
    %1515 = vmatpush1.msra.mxu0 0.0
    %1516 = vmatprep.subr.mxu0 0.0
    %1517 = vmatpush1.msra.mxu0 0.0
    %1518 = vmatprep.subr.mxu0 0.0
    %1519 = vmatpush1.msra.mxu0 0.0
    %1520 = vmatprep.subr.mxu0 0.0
    %1521 = vmatpush1.msra.mxu0 0.0
    %1522 = vmatprep.subr.mxu0 0.0
    %1523 = vmatpush1.msra.mxu0 0.0
    %1524 = vmatprep.subr.mxu0 0.0
    %1525 = vmatpush1.msra.mxu0 0.0
    %1526 = vmatprep.subr.mxu0 0.0
    %1527 = vmatpush1.msra.mxu0 0.0
    %1528 = vmatprep.mubr.f32.mxu0 0.0
    %1529 = vmatmul.mubr.f32.gmra.mrb[0].mxu0 %v1435
    %v1530 = vpop.f32.mrb[0].mxu0
    %v1531 = vadd.f32 %v1388, %v1530
    %v1532 = vpop.f32.mrb[0].mxu0
    %v1533 = vadd.f32 %v1390, %v1532
    %1534 = vmatprep.mubr.f32.mxu0 0.0
    %1535 = vmatmul.mubr.f32.gmra.mrb[0].mxu0 %v1438
    %v1536 = vpop.f32.mrb[0].mxu0
    %v1537 = vadd.f32 %v1394, %v1536
    %v1538 = vpop.f32.mrb[0].mxu0
    %v1539 = vadd.f32 %v1396, %v1538
    %1540 = vmatprep.mubr.f32.mxu0 0.0
    %1541 = vmatmul.mubr.f32.gmra.mrb[0].mxu0 %v1441
    %v1542 = vpop.f32.mrb[0].mxu0
    %v1543 = vadd.f32 %v1400, %v1542
    %v1544 = vpop.f32.mrb[0].mxu0
    %v1545 = vadd.f32 %v1402, %v1544
    %1546 = vmatprep.mubr.f32.mxu0 0.0
    %1547 = vmatmul.mubr.f32.gmra.mrb[0].mxu0 %v1444
    %v1548 = vpop.f32.mrb[0].mxu0
    %v1549 = vadd.f32 %v1406, %v1548
    %v1550 = vpop.f32.mrb[0].mxu0
    %v1551 = vadd.f32 %v1408, %v1550
    %1552 = vmatprep.mubr.f32.mxu0 0.0
    %1553 = vmatmul.mubr.f32.gmra.mrb[0].mxu0 %v1447
    %v1554 = vpop.f32.mrb[0].mxu0
    %v1555 = vadd.f32 %v1412, %v1554
    %v1556 = vpop.f32.mrb[0].mxu0
    %v1557 = vadd.f32 %v1414, %v1556
    %1558 = vmatprep.mubr.f32.mxu0 0.0
    %1559 = vmatmul.mubr.f32.gmra.mrb[0].mxu0 %v1450
    %v1560 = vpop.f32.mrb[0].mxu0
    %v1561 = vadd.f32 %v1418, %v1560
    %v1562 = vpop.f32.mrb[0].mxu0
    %v1563 = vadd.f32 %v1420, %v1562
    %1564 = vmatprep.mubr.f32.mxu0 0.0
    %1565 = vmatmul.mubr.f32.gmra.mrb[0].mxu0 %v1453
    %v1566 = vpop.f32.mrb[0].mxu0
    %v1567 = vadd.f32 %v1424, %v1566
    %v1568 = vpop.f32.mrb[0].mxu0
    %v1569 = vadd.f32 %v1426, %v1568
    %1570 = vmatprep.mubr.f32.mxu0 0.0
    %1571 = vmatmul.mubr.f32.gmra.mrb[0].mxu0 %v1456
    %v1572 = vpop.f32.mrb[0].mxu0
    %v1573 = vadd.f32 %v1430, %v1572
    %v1574 = vpop.f32.mrb[0].mxu0
    %v1575 = vadd.f32 %v1432, %v1574
    %1576 = vdwg.mxu0
    %v1577 = vrot.slane %v1220, 4
    %v1578 = vrot.slane %v1221, 4
    %v1579 = vrot.slane %v1222, 4
    %v1580 = vrot.slane %v1223, 4
    %v1581 = vrot.slane %v1224, 4
    %v1582 = vrot.slane %v1225, 4
    %v1583 = vrot.slane %v1226, 4
    %v1584 = vrot.slane %v1227, 4
    %v1585 = vsel %vm886, %v1583, %v1584
    %v1586 = vsel %vm886, %v1582, %v1583
    %v1587 = vsel %vm886, %v1581, %v1582
    %v1588 = vsel %vm886, %v1580, %v1581
    %v1589 = vsel %vm886, %v1579, %v1580
    %v1590 = vsel %vm886, %v1578, %v1579
    %v1591 = vsel %vm886, %v1577, %v1578
    %v1592 = vsel %vm886, %v1584, %v1577
    %s1593 = scalar_lea.vmem %s3, 352
    %v1594 = vld [vmem:[%s1593] sm:$0xff]
    %v1595 = vld [vmem:[%s1593 + $0x8] sm:$0xff]
    %v1596 = vld [vmem:[%s1593 + $0x10] sm:$0xff]
    %v1597 = vld [vmem:[%s1593 + $0x18] sm:$0xff]
    %v1598 = vld [vmem:[%s1593 + $0x20] sm:$0xff]
    %v1599 = vld [vmem:[%s1593 + $0x28] sm:$0xff]
    %v1600 = vld [vmem:[%s1593 + $0x30] sm:$0xff]
    %v1601 = vld [vmem:[%s1593 + $0x38] sm:$0xff]
    %v1602 = vld [vmem:[%s1593 + $0x40] sm:$0xff]
    %v1603 = vld [vmem:[%s1593 + $0x48] sm:$0xff]
    %v1604 = vld [vmem:[%s1593 + $0x50] sm:$0xff]
    %v1605 = vld [vmem:[%s1593 + $0x58] sm:$0xff]
    %v1606 = vld [vmem:[%s1593 + $0x60] sm:$0xff]
    %v1607 = vld [vmem:[%s1593 + $0x68] sm:$0xff]
    %v1608 = vld [vmem:[%s1593 + $0x70] sm:$0xff]
    %v1609 = vld [vmem:[%s1593 + $0x78] sm:$0xff]
    %v1610 = vld [vmem:[%s1593 + $0x80] sm:$0xff]
    %v1611 = vld [vmem:[%s1593 + $0x88] sm:$0xff]
    %v1612 = vld [vmem:[%s1593 + $0x90] sm:$0xff]
    %v1613 = vld [vmem:[%s1593 + $0x98] sm:$0xff]
    %v1614 = vld [vmem:[%s1593 + $0xa0] sm:$0xf]
    %v1615 = vld [vmem:[%s1593 + $0xa8] sm:$0xf]
    %v1617 = vsel %vm1289, %v1591, 0
    %v1620 = vsel %vm1289, %v1590, 0
    %v1623 = vsel %vm1289, %v1589, 0
    %v1626 = vsel %vm1289, %v1588, 0
    %v1629 = vsel %vm1289, %v1587, 0
    %v1632 = vsel %vm1289, %v1586, 0
    %v1635 = vsel %vm1289, %v1585, 0
    %v1638 = vsel %vm1289, %v1592, 0
    %v1641 = vsel %vm1314, %v1614, 0
    %v1644 = vsel %vm1314, %v1615, 0
    %1646 = vmatprep.subr.mxu0 %v1595
    %1647 = vmatpush1.msra.mxu0 %v1594
    %1648 = vmatprep.subr.mxu0 %v1597
    %1649 = vmatpush1.msra.mxu0 %v1596
    %1650 = vmatprep.subr.mxu0 %v1599
    %1651 = vmatpush1.msra.mxu0 %v1598
    %1652 = vmatprep.subr.mxu0 %v1601
    %1653 = vmatpush1.msra.mxu0 %v1600
    %1654 = vmatprep.subr.mxu0 %v1603
    %1655 = vmatpush1.msra.mxu0 %v1602
    %1656 = vmatprep.subr.mxu0 %v1605
    %1657 = vmatpush1.msra.mxu0 %v1604
    %1658 = vmatprep.subr.mxu0 %v1607
    %1659 = vmatpush1.msra.mxu0 %v1606
    %1660 = vmatprep.subr.mxu0 %v1609
    %1661 = vmatpush1.msra.mxu0 %v1608
    %1662 = vmatprep.subr.mxu0 %v1611
    %1663 = vmatpush1.msra.mxu0 %v1610
    %1664 = vmatprep.subr.mxu0 %v1613
    %1665 = vmatpush1.msra.mxu0 %v1612
    %1666 = vmatprep.subr.mxu0 %v1644
    %1667 = vmatpush1.msra.mxu0 %v1641
    %1668 = vmatprep.subr.mxu0 0.0
    %1669 = vmatpush1.msra.mxu0 0.0
    %1670 = vmatprep.subr.mxu0 0.0
    %1671 = vmatpush1.msra.mxu0 0.0
    %1672 = vmatprep.subr.mxu0 0.0
    %1673 = vmatpush1.msra.mxu0 0.0
    %1674 = vmatprep.subr.mxu0 0.0
    %1675 = vmatpush1.msra.mxu0 0.0
    %1676 = vmatprep.subr.mxu0 0.0
    %1677 = vmatpush1.msra.mxu0 0.0
    %1678 = vmatprep.subr.mxu0 0.0
    %1679 = vmatpush1.msra.mxu0 0.0
    %1680 = vmatprep.subr.mxu0 0.0
    %1681 = vmatpush1.msra.mxu0 0.0
    %1682 = vmatprep.subr.mxu0 0.0
    %1683 = vmatpush1.msra.mxu0 0.0
    %1684 = vmatprep.subr.mxu0 0.0
    %1685 = vmatpush1.msra.mxu0 0.0
    %1686 = vmatprep.subr.mxu0 0.0
    %1687 = vmatpush1.msra.mxu0 0.0
    %1688 = vmatprep.subr.mxu0 0.0
    %1689 = vmatpush1.msra.mxu0 0.0
    %1690 = vmatprep.subr.mxu0 0.0
    %1691 = vmatpush1.msra.mxu0 0.0
    %1692 = vmatprep.subr.mxu0 0.0
    %1693 = vmatpush1.msra.mxu0 0.0
    %1694 = vmatprep.subr.mxu0 0.0
    %1695 = vmatpush1.msra.mxu0 0.0
    %1696 = vmatprep.subr.mxu0 0.0
    %1697 = vmatpush1.msra.mxu0 0.0
    %1698 = vmatprep.subr.mxu0 0.0
    %1699 = vmatpush1.msra.mxu0 0.0
    %1700 = vmatprep.subr.mxu0 0.0
    %1701 = vmatpush1.msra.mxu0 0.0
    %1702 = vmatprep.subr.mxu0 0.0
    %1703 = vmatpush1.msra.mxu0 0.0
    %1704 = vmatprep.subr.mxu0 0.0
    %1705 = vmatpush1.msra.mxu0 0.0
    %1706 = vmatprep.subr.mxu0 0.0
    %1707 = vmatpush1.msra.mxu0 0.0
    %1708 = vmatprep.subr.mxu0 0.0
    %1709 = vmatpush1.msra.mxu0 0.0
    %1710 = vmatprep.mubr.f32.mxu0 0.0
    %1711 = vmatmul.mubr.f32.gmra.mrb[0].mxu0 %v1617
    %v1712 = vpop.f32.mrb[0].mxu0
    %v1713 = vadd.f32 0.0, %v1712
    %v1714 = vpop.f32.mrb[0].mxu0
    %v1715 = vadd.f32 0.0, %v1714
    %1716 = vmatprep.mubr.f32.mxu0 0.0
    %1717 = vmatmul.mubr.f32.gmra.mrb[0].mxu0 %v1620
    %v1718 = vpop.f32.mrb[0].mxu0
    %v1719 = vadd.f32 0.0, %v1718
    %v1720 = vpop.f32.mrb[0].mxu0
    %v1721 = vadd.f32 0.0, %v1720
    %1722 = vmatprep.mubr.f32.mxu0 0.0
    %1723 = vmatmul.mubr.f32.gmra.mrb[0].mxu0 %v1623
    %v1724 = vpop.f32.mrb[0].mxu0
    %v1725 = vadd.f32 0.0, %v1724
    %v1726 = vpop.f32.mrb[0].mxu0
    %v1727 = vadd.f32 0.0, %v1726
    %1728 = vmatprep.mubr.f32.mxu0 0.0
    %1729 = vmatmul.mubr.f32.gmra.mrb[0].mxu0 %v1626
    %v1730 = vpop.f32.mrb[0].mxu0
    %v1731 = vadd.f32 0.0, %v1730
    %v1732 = vpop.f32.mrb[0].mxu0
    %v1733 = vadd.f32 0.0, %v1732
    %1734 = vmatprep.mubr.f32.mxu0 0.0
    %1735 = vmatmul.mubr.f32.gmra.mrb[0].mxu0 %v1629
    %v1736 = vpop.f32.mrb[0].mxu0
    %v1737 = vadd.f32 0.0, %v1736
    %v1738 = vpop.f32.mrb[0].mxu0
    %v1739 = vadd.f32 0.0, %v1738
    %1740 = vmatprep.mubr.f32.mxu0 0.0
    %1741 = vmatmul.mubr.f32.gmra.mrb[0].mxu0 %v1632
    %v1742 = vpop.f32.mrb[0].mxu0
    %v1743 = vadd.f32 0.0, %v1742
    %v1744 = vpop.f32.mrb[0].mxu0
    %v1745 = vadd.f32 0.0, %v1744
    %1746 = vmatprep.mubr.f32.mxu0 0.0
    %1747 = vmatmul.mubr.f32.gmra.mrb[0].mxu0 %v1635
    %v1748 = vpop.f32.mrb[0].mxu0
    %v1749 = vadd.f32 0.0, %v1748
    %v1750 = vpop.f32.mrb[0].mxu0
    %v1751 = vadd.f32 0.0, %v1750
    %1752 = vmatprep.mubr.f32.mxu0 0.0
    %1753 = vmatmul.mubr.f32.gmra.mrb[0].mxu0 %v1638
    %v1754 = vpop.f32.mrb[0].mxu0
    %v1755 = vadd.f32 0.0, %v1754
    %v1756 = vpop.f32.mrb[0].mxu0
    %v1757 = vadd.f32 0.0, %v1756
    %1758 = vdwg.mxu0
    %v1759 = vadd.f32 %v1531, %v1713
    %v1760 = vadd.f32 %v1533, %v1715
    %v1761 = vadd.f32 %v1537, %v1719
    %v1762 = vadd.f32 %v1539, %v1721
    %v1763 = vadd.f32 %v1543, %v1725
    %v1764 = vadd.f32 %v1545, %v1727
    %v1765 = vadd.f32 %v1549, %v1731
    %v1766 = vadd.f32 %v1551, %v1733
    %v1767 = vadd.f32 %v1555, %v1737
    %v1768 = vadd.f32 %v1557, %v1739
    %v1769 = vadd.f32 %v1561, %v1743
    %v1770 = vadd.f32 %v1563, %v1745
    %v1771 = vadd.f32 %v1567, %v1749
    %v1772 = vadd.f32 %v1569, %v1751
    %v1773 = vadd.f32 %v1573, %v1755
    %v1774 = vadd.f32 %v1575, %v1757
    %v1775 = vrot.slane %v1220, 6
    %v1776 = vrot.slane %v1221, 6
    %v1777 = vrot.slane %v1222, 6
    %v1778 = vrot.slane %v1223, 6
    %v1779 = vrot.slane %v1224, 6
    %v1780 = vrot.slane %v1225, 6
    %v1781 = vrot.slane %v1226, 6
    %v1782 = vrot.slane %v1227, 6
    %vm1783 = vcmp.lt.s32.totalorder %v178, 2
    %v1784 = vsel %vm1783, %v1781, %v1782
    %v1785 = vsel %vm1783, %v1780, %v1781
    %v1786 = vsel %vm1783, %v1779, %v1780
    %v1787 = vsel %vm1783, %v1778, %v1779
    %v1788 = vsel %vm1783, %v1777, %v1778
    %v1789 = vsel %vm1783, %v1776, %v1777
    %v1790 = vsel %vm1783, %v1775, %v1776
    %v1791 = vsel %vm1783, %v1782, %v1775
    %s1792 = scalar_lea.vmem %s3, 528
    %v1793 = vld [vmem:[%s1792] sm:$0xff]
    %v1794 = vld [vmem:[%s1792 + $0x8] sm:$0xff]
    %v1795 = vld [vmem:[%s1792 + $0x10] sm:$0xff]
    %v1796 = vld [vmem:[%s1792 + $0x18] sm:$0xff]
    %v1797 = vld [vmem:[%s1792 + $0x20] sm:$0xff]
    %v1798 = vld [vmem:[%s1792 + $0x28] sm:$0xff]
    %v1799 = vld [vmem:[%s1792 + $0x30] sm:$0xff]
    %v1800 = vld [vmem:[%s1792 + $0x38] sm:$0xff]
    %v1801 = vld [vmem:[%s1792 + $0x40] sm:$0xff]
    %v1802 = vld [vmem:[%s1792 + $0x48] sm:$0xff]
    %v1803 = vld [vmem:[%s1792 + $0x50] sm:$0xff]
    %v1804 = vld [vmem:[%s1792 + $0x58] sm:$0xff]
    %v1805 = vld [vmem:[%s1792 + $0x60] sm:$0xff]
    %v1806 = vld [vmem:[%s1792 + $0x68] sm:$0xff]
    %v1807 = vld [vmem:[%s1792 + $0x70] sm:$0xff]
    %v1808 = vld [vmem:[%s1792 + $0x78] sm:$0xff]
    %v1809 = vld [vmem:[%s1792 + $0x80] sm:$0xff]
    %v1810 = vld [vmem:[%s1792 + $0x88] sm:$0xff]
    %v1811 = vld [vmem:[%s1792 + $0x90] sm:$0xff]
    %v1812 = vld [vmem:[%s1792 + $0x98] sm:$0xff]
    %v1813 = vld [vmem:[%s1792 + $0xa0] sm:$0xf]
    %v1814 = vld [vmem:[%s1792 + $0xa8] sm:$0xf]
    %v1816 = vsel %vm1289, %v1790, 0
    %v1819 = vsel %vm1289, %v1789, 0
    %v1822 = vsel %vm1289, %v1788, 0
    %v1825 = vsel %vm1289, %v1787, 0
    %v1828 = vsel %vm1289, %v1786, 0
    %v1831 = vsel %vm1289, %v1785, 0
    %v1834 = vsel %vm1289, %v1784, 0
    %v1837 = vsel %vm1289, %v1791, 0
    %v1840 = vsel %vm1314, %v1813, 0
    %v1843 = vsel %vm1314, %v1814, 0
    %1845 = vmatprep.subr.mxu0 %v1794
    %1846 = vmatpush1.msra.mxu0 %v1793
    %1847 = vmatprep.subr.mxu0 %v1796
    %1848 = vmatpush1.msra.mxu0 %v1795
    %1849 = vmatprep.subr.mxu0 %v1798
    %1850 = vmatpush1.msra.mxu0 %v1797
    %1851 = vmatprep.subr.mxu0 %v1800
    %1852 = vmatpush1.msra.mxu0 %v1799
    %1853 = vmatprep.subr.mxu0 %v1802
    %1854 = vmatpush1.msra.mxu0 %v1801
    %1855 = vmatprep.subr.mxu0 %v1804
    %1856 = vmatpush1.msra.mxu0 %v1803
    %1857 = vmatprep.subr.mxu0 %v1806
    %1858 = vmatpush1.msra.mxu0 %v1805
    %1859 = vmatprep.subr.mxu0 %v1808
    %1860 = vmatpush1.msra.mxu0 %v1807
    %1861 = vmatprep.subr.mxu0 %v1810
    %1862 = vmatpush1.msra.mxu0 %v1809
    %1863 = vmatprep.subr.mxu0 %v1812
    %1864 = vmatpush1.msra.mxu0 %v1811
    %1865 = vmatprep.subr.mxu0 %v1843
    %1866 = vmatpush1.msra.mxu0 %v1840
    %1867 = vmatprep.subr.mxu0 0.0
    %1868 = vmatpush1.msra.mxu0 0.0
    %1869 = vmatprep.subr.mxu0 0.0
    %1870 = vmatpush1.msra.mxu0 0.0
    %1871 = vmatprep.subr.mxu0 0.0
    %1872 = vmatpush1.msra.mxu0 0.0
    %1873 = vmatprep.subr.mxu0 0.0
    %1874 = vmatpush1.msra.mxu0 0.0
    %1875 = vmatprep.subr.mxu0 0.0
    %1876 = vmatpush1.msra.mxu0 0.0
    %1877 = vmatprep.subr.mxu0 0.0
    %1878 = vmatpush1.msra.mxu0 0.0
    %1879 = vmatprep.subr.mxu0 0.0
    %1880 = vmatpush1.msra.mxu0 0.0
    %1881 = vmatprep.subr.mxu0 0.0
    %1882 = vmatpush1.msra.mxu0 0.0
    %1883 = vmatprep.subr.mxu0 0.0
    %1884 = vmatpush1.msra.mxu0 0.0
    %1885 = vmatprep.subr.mxu0 0.0
    %1886 = vmatpush1.msra.mxu0 0.0
    %1887 = vmatprep.subr.mxu0 0.0
    %1888 = vmatpush1.msra.mxu0 0.0
    %1889 = vmatprep.subr.mxu0 0.0
    %1890 = vmatpush1.msra.mxu0 0.0
    %1891 = vmatprep.subr.mxu0 0.0
    %1892 = vmatpush1.msra.mxu0 0.0
    %1893 = vmatprep.subr.mxu0 0.0
    %1894 = vmatpush1.msra.mxu0 0.0
    %1895 = vmatprep.subr.mxu0 0.0
    %1896 = vmatpush1.msra.mxu0 0.0
    %1897 = vmatprep.subr.mxu0 0.0
    %1898 = vmatpush1.msra.mxu0 0.0
    %1899 = vmatprep.subr.mxu0 0.0
    %1900 = vmatpush1.msra.mxu0 0.0
    %1901 = vmatprep.subr.mxu0 0.0
    %1902 = vmatpush1.msra.mxu0 0.0
    %1903 = vmatprep.subr.mxu0 0.0
    %1904 = vmatpush1.msra.mxu0 0.0
    %1905 = vmatprep.subr.mxu0 0.0
    %1906 = vmatpush1.msra.mxu0 0.0
    %1907 = vmatprep.subr.mxu0 0.0
    %1908 = vmatpush1.msra.mxu0 0.0
    %1909 = vmatprep.mubr.f32.mxu0 0.0
    %1910 = vmatmul.mubr.f32.gmra.mrb[0].mxu0 %v1816
    %v1911 = vpop.f32.mrb[0].mxu0
    %v1912 = vadd.f32 0.0, %v1911
    %v1913 = vpop.f32.mrb[0].mxu0
    %v1914 = vadd.f32 0.0, %v1913
    %1915 = vmatprep.mubr.f32.mxu0 0.0
    %1916 = vmatmul.mubr.f32.gmra.mrb[0].mxu0 %v1819
    %v1917 = vpop.f32.mrb[0].mxu0
    %v1918 = vadd.f32 0.0, %v1917
    %v1919 = vpop.f32.mrb[0].mxu0
    %v1920 = vadd.f32 0.0, %v1919
    %1921 = vmatprep.mubr.f32.mxu0 0.0
    %1922 = vmatmul.mubr.f32.gmra.mrb[0].mxu0 %v1822
    %v1923 = vpop.f32.mrb[0].mxu0
    %v1924 = vadd.f32 0.0, %v1923
    %v1925 = vpop.f32.mrb[0].mxu0
    %v1926 = vadd.f32 0.0, %v1925
    %1927 = vmatprep.mubr.f32.mxu0 0.0
    %1928 = vmatmul.mubr.f32.gmra.mrb[0].mxu0 %v1825
    %v1929 = vpop.f32.mrb[0].mxu0
    %v1930 = vadd.f32 0.0, %v1929
    %v1931 = vpop.f32.mrb[0].mxu0
    %v1932 = vadd.f32 0.0, %v1931
    %1933 = vmatprep.mubr.f32.mxu0 0.0
    %1934 = vmatmul.mubr.f32.gmra.mrb[0].mxu0 %v1828
    %v1935 = vpop.f32.mrb[0].mxu0
    %v1936 = vadd.f32 0.0, %v1935
    %v1937 = vpop.f32.mrb[0].mxu0
    %v1938 = vadd.f32 0.0, %v1937
    %1939 = vmatprep.mubr.f32.mxu0 0.0
    %1940 = vmatmul.mubr.f32.gmra.mrb[0].mxu0 %v1831
    %v1941 = vpop.f32.mrb[0].mxu0
    %v1942 = vadd.f32 0.0, %v1941
    %v1943 = vpop.f32.mrb[0].mxu0
    %v1944 = vadd.f32 0.0, %v1943
    %1945 = vmatprep.mubr.f32.mxu0 0.0
    %1946 = vmatmul.mubr.f32.gmra.mrb[0].mxu0 %v1834
    %v1947 = vpop.f32.mrb[0].mxu0
    %v1948 = vadd.f32 0.0, %v1947
    %v1949 = vpop.f32.mrb[0].mxu0
    %v1950 = vadd.f32 0.0, %v1949
    %1951 = vmatprep.mubr.f32.mxu0 0.0
    %1952 = vmatmul.mubr.f32.gmra.mrb[0].mxu0 %v1837
    %v1953 = vpop.f32.mrb[0].mxu0
    %v1954 = vadd.f32 0.0, %v1953
    %v1955 = vpop.f32.mrb[0].mxu0
    %v1956 = vadd.f32 0.0, %v1955
    %1957 = vdwg.mxu0
    %v1958 = vadd.f32 %v1759, %v1912
    %v1959 = vadd.f32 %v1760, %v1914
    %v1960 = vadd.f32 %v1761, %v1918
    %v1961 = vadd.f32 %v1762, %v1920
    %v1962 = vadd.f32 %v1763, %v1924
    %v1963 = vadd.f32 %v1764, %v1926
    %v1964 = vadd.f32 %v1765, %v1930
    %v1965 = vadd.f32 %v1766, %v1932
    %v1966 = vadd.f32 %v1767, %v1936
    %v1967 = vadd.f32 %v1768, %v1938
    %v1968 = vadd.f32 %v1769, %v1942
    %v1969 = vadd.f32 %v1770, %v1944
    %v1970 = vadd.f32 %v1771, %v1948
    %v1971 = vadd.f32 %v1772, %v1950
    %v1972 = vadd.f32 %v1773, %v1954
    %v1973 = vadd.f32 %v1774, %v1956
    %s1974 = scalar_lea.vmem %s3, 704
    %v1975 = vld [vmem:[%s1974] sm:$0xff]
    %v1976 = vld [vmem:[%s1974 + $0x8] sm:$0xff]
    %v1977 = vld [vmem:[%s1974 + $0x10] sm:$0xff]
    %v1978 = vld [vmem:[%s1974 + $0x18] sm:$0xff]
    %v1979 = vld [vmem:[%s1974 + $0x20] sm:$0xff]
    %v1980 = vld [vmem:[%s1974 + $0x28] sm:$0xff]
    %v1981 = vld [vmem:[%s1974 + $0x30] sm:$0xff]
    %v1982 = vld [vmem:[%s1974 + $0x38] sm:$0xff]
    %v1983 = vld [vmem:[%s1974 + $0x40] sm:$0xff]
    %v1984 = vld [vmem:[%s1974 + $0x48] sm:$0xff]
    %v1985 = vld [vmem:[%s1974 + $0x50] sm:$0xff]
    %v1986 = vld [vmem:[%s1974 + $0x58] sm:$0xff]
    %v1987 = vld [vmem:[%s1974 + $0x60] sm:$0xff]
    %v1988 = vld [vmem:[%s1974 + $0x68] sm:$0xff]
    %v1989 = vld [vmem:[%s1974 + $0x70] sm:$0xff]
    %v1990 = vld [vmem:[%s1974 + $0x78] sm:$0xff]
    %v1991 = vld [vmem:[%s1974 + $0x80] sm:$0xff]
    %v1992 = vld [vmem:[%s1974 + $0x88] sm:$0xff]
    %v1993 = vld [vmem:[%s1974 + $0x90] sm:$0xff]
    %v1994 = vld [vmem:[%s1974 + $0x98] sm:$0xff]
    %v1995 = vld [vmem:[%s1974 + $0xa0] sm:$0xf]
    %v1996 = vld [vmem:[%s1974 + $0xa8] sm:$0xf]
    %v1998 = vsel %vm1314, %v1995, 0
    %v2001 = vsel %vm1314, %v1996, 0
    %2003 = vmatprep.subr.mxu0 %v1976
    %2004 = vmatpush1.msra.mxu0 %v1975
    %2005 = vmatprep.subr.mxu0 %v1978
    %2006 = vmatpush1.msra.mxu0 %v1977
    %2007 = vmatprep.subr.mxu0 %v1980
    %2008 = vmatpush1.msra.mxu0 %v1979
    %2009 = vmatprep.subr.mxu0 %v1982
    %2010 = vmatpush1.msra.mxu0 %v1981
    %2011 = vmatprep.subr.mxu0 %v1984
    %2012 = vmatpush1.msra.mxu0 %v1983
    %2013 = vmatprep.subr.mxu0 %v1986
    %2014 = vmatpush1.msra.mxu0 %v1985
    %2015 = vmatprep.subr.mxu0 %v1988
    %2016 = vmatpush1.msra.mxu0 %v1987
    %2017 = vmatprep.subr.mxu0 %v1990
    %2018 = vmatpush1.msra.mxu0 %v1989
    %2019 = vmatprep.subr.mxu0 %v1992
    %2020 = vmatpush1.msra.mxu0 %v1991
    %2021 = vmatprep.subr.mxu0 %v1994
    %2022 = vmatpush1.msra.mxu0 %v1993
    %2023 = vmatprep.subr.mxu0 %v2001
    %2024 = vmatpush1.msra.mxu0 %v1998
    %2025 = vmatprep.subr.mxu0 0.0
    %2026 = vmatpush1.msra.mxu0 0.0
    %2027 = vmatprep.subr.mxu0 0.0
    %2028 = vmatpush1.msra.mxu0 0.0
    %2029 = vmatprep.subr.mxu0 0.0
    %2030 = vmatpush1.msra.mxu0 0.0
    %2031 = vmatprep.subr.mxu0 0.0
    %2032 = vmatpush1.msra.mxu0 0.0
    %2033 = vmatprep.subr.mxu0 0.0
    %2034 = vmatpush1.msra.mxu0 0.0
    %2035 = vmatprep.subr.mxu0 0.0
    %2036 = vmatpush1.msra.mxu0 0.0
    %2037 = vmatprep.subr.mxu0 0.0
    %2038 = vmatpush1.msra.mxu0 0.0
    %2039 = vmatprep.subr.mxu0 0.0
    %2040 = vmatpush1.msra.mxu0 0.0
    %2041 = vmatprep.subr.mxu0 0.0
    %2042 = vmatpush1.msra.mxu0 0.0
    %2043 = vmatprep.subr.mxu0 0.0
    %2044 = vmatpush1.msra.mxu0 0.0
    %2045 = vmatprep.subr.mxu0 0.0
    %2046 = vmatpush1.msra.mxu0 0.0
    %2047 = vmatprep.subr.mxu0 0.0
    %2048 = vmatpush1.msra.mxu0 0.0
    %2049 = vmatprep.subr.mxu0 0.0
    %2050 = vmatpush1.msra.mxu0 0.0
    %2051 = vmatprep.subr.mxu0 0.0
    %2052 = vmatpush1.msra.mxu0 0.0
    %2053 = vmatprep.subr.mxu0 0.0
    %2054 = vmatpush1.msra.mxu0 0.0
    %2055 = vmatprep.subr.mxu0 0.0
    %2056 = vmatpush1.msra.mxu0 0.0
    %2057 = vmatprep.subr.mxu0 0.0
    %2058 = vmatpush1.msra.mxu0 0.0
    %2059 = vmatprep.subr.mxu0 0.0
    %2060 = vmatpush1.msra.mxu0 0.0
    %2061 = vmatprep.subr.mxu0 0.0
    %2062 = vmatpush1.msra.mxu0 0.0
    %2063 = vmatprep.subr.mxu0 0.0
    %2064 = vmatpush1.msra.mxu0 0.0
    %2065 = vmatprep.subr.mxu0 0.0
    %2066 = vmatpush1.msra.mxu0 0.0
    %2067 = vmatprep.mubr.f32.mxu0 0.0
    %2068 = vmatmul.mubr.f32.gmra.mrb[0].mxu0 %v1438
    %v2069 = vpop.f32.mrb[0].mxu0
    %v2070 = vadd.f32 0.0, %v2069
    %v2071 = vpop.f32.mrb[0].mxu0
    %v2072 = vadd.f32 0.0, %v2071
    %2073 = vmatprep.mubr.f32.mxu0 0.0
    %2074 = vmatmul.mubr.f32.gmra.mrb[0].mxu0 %v1441
    %v2075 = vpop.f32.mrb[0].mxu0
    %v2076 = vadd.f32 0.0, %v2075
    %v2077 = vpop.f32.mrb[0].mxu0
    %v2078 = vadd.f32 0.0, %v2077
    %2079 = vmatprep.mubr.f32.mxu0 0.0
    %2080 = vmatmul.mubr.f32.gmra.mrb[0].mxu0 %v1444
    %v2081 = vpop.f32.mrb[0].mxu0
    %v2082 = vadd.f32 0.0, %v2081
    %v2083 = vpop.f32.mrb[0].mxu0
    %v2084 = vadd.f32 0.0, %v2083
    %2085 = vmatprep.mubr.f32.mxu0 0.0
    %2086 = vmatmul.mubr.f32.gmra.mrb[0].mxu0 %v1447
    %v2087 = vpop.f32.mrb[0].mxu0
    %v2088 = vadd.f32 0.0, %v2087
    %v2089 = vpop.f32.mrb[0].mxu0
    %v2090 = vadd.f32 0.0, %v2089
    %2091 = vmatprep.mubr.f32.mxu0 0.0
    %2092 = vmatmul.mubr.f32.gmra.mrb[0].mxu0 %v1450
    %v2093 = vpop.f32.mrb[0].mxu0
    %v2094 = vadd.f32 0.0, %v2093
    %v2095 = vpop.f32.mrb[0].mxu0
    %v2096 = vadd.f32 0.0, %v2095
    %2097 = vmatprep.mubr.f32.mxu0 0.0
    %2098 = vmatmul.mubr.f32.gmra.mrb[0].mxu0 %v1453
    %v2099 = vpop.f32.mrb[0].mxu0
    %v2100 = vadd.f32 0.0, %v2099
    %v2101 = vpop.f32.mrb[0].mxu0
    %v2102 = vadd.f32 0.0, %v2101
    %2103 = vmatprep.mubr.f32.mxu0 0.0
    %2104 = vmatmul.mubr.f32.gmra.mrb[0].mxu0 %v1456
    %v2105 = vpop.f32.mrb[0].mxu0
    %v2106 = vadd.f32 0.0, %v2105
    %v2107 = vpop.f32.mrb[0].mxu0
    %v2108 = vadd.f32 0.0, %v2107
    %2109 = vmatprep.mubr.f32.mxu0 0.0
    %2110 = vmatmul.mubr.f32.gmra.mrb[0].mxu0 %v1435
    %v2111 = vpop.f32.mrb[0].mxu0
    %v2112 = vadd.f32 0.0, %v2111
    %v2113 = vpop.f32.mrb[0].mxu0
    %v2114 = vadd.f32 0.0, %v2113
    %2115 = vdwg.mxu0
    %v2116 = vadd.f32 %v1958, %v2070
    %v2117 = vadd.f32 %v1959, %v2072
    %v2118 = vadd.f32 %v1960, %v2076
    %v2119 = vadd.f32 %v1961, %v2078
    %v2120 = vadd.f32 %v1962, %v2082
    %v2121 = vadd.f32 %v1963, %v2084
    %v2122 = vadd.f32 %v1964, %v2088
    %v2123 = vadd.f32 %v1965, %v2090
    %v2124 = vadd.f32 %v1966, %v2094
    %v2125 = vadd.f32 %v1967, %v2096
    %v2126 = vadd.f32 %v1968, %v2100
    %v2127 = vadd.f32 %v1969, %v2102
    %v2128 = vadd.f32 %v1970, %v2106
    %v2129 = vadd.f32 %v1971, %v2108
    %v2130 = vadd.f32 %v1972, %v2112
    %v2131 = vadd.f32 %v1973, %v2114
    %v2132 = vld [vmem:[%s4] sm:$0x1]
    %v2134 = vlaneseq
    %v2135 = vshrl.u32 %v2134, 7
    %v2136 = vsub.s32 0, %v2135
    %v2137 = vrot.slane %v2132, %v2136
    %v2139 = vadd.f32 %v2116, %v2137
    %v2140 = vadd.f32 %v2118, %v2137
    %v2141 = vadd.f32 %v2120, %v2137
    %v2142 = vadd.f32 %v2122, %v2137
    %v2143 = vadd.f32 %v2124, %v2137
    %v2144 = vadd.f32 %v2126, %v2137
    %v2145 = vadd.f32 %v2128, %v2137
    %v2146 = vadd.f32 %v2130, %v2137
    %v2147 = vmax.f32 %v2139, 0.0
    %v2148 = vmax.f32 %v2140, 0.0
    %v2149 = vmax.f32 %v2141, 0.0
    %v2150 = vmax.f32 %v2142, 0.0
    %v2151 = vmax.f32 %v2143, 0.0
    %v2152 = vmax.f32 %v2144, 0.0
    %v2153 = vmax.f32 %v2145, 0.0
    %v2154 = vmax.f32 %v2146, 0.0
    %2155 = vrot.lane.b32.xlu0 %v2137, 80
    %v2156 = vpop.permute.xlu0 %2155
    %v2158 = vadd.f32 %v2116, %v2156
    %v2159 = vadd.f32 %v2117, %v2156
    %v2160 = vadd.f32 %v2118, %v2156
    %v2161 = vadd.f32 %v2119, %v2156
    %v2162 = vadd.f32 %v2120, %v2156
    %v2163 = vadd.f32 %v2121, %v2156
    %v2164 = vadd.f32 %v2122, %v2156
    %v2165 = vadd.f32 %v2123, %v2156
    %v2166 = vadd.f32 %v2124, %v2156
    %v2167 = vadd.f32 %v2125, %v2156
    %v2168 = vadd.f32 %v2126, %v2156
    %v2169 = vadd.f32 %v2127, %v2156
    %v2170 = vadd.f32 %v2128, %v2156
    %v2171 = vadd.f32 %v2129, %v2156
    %v2172 = vadd.f32 %v2130, %v2156
    %v2173 = vadd.f32 %v2131, %v2156
    %v2174 = vmax.f32 %v2158, 0.0
    %v2175 = vmax.f32 %v2159, 0.0
    %v2176 = vmax.f32 %v2160, 0.0
    %v2177 = vmax.f32 %v2161, 0.0
    %v2178 = vmax.f32 %v2162, 0.0
    %v2179 = vmax.f32 %v2163, 0.0
    %v2180 = vmax.f32 %v2164, 0.0
    %v2181 = vmax.f32 %v2165, 0.0
    %v2182 = vmax.f32 %v2166, 0.0
    %v2183 = vmax.f32 %v2167, 0.0
    %v2184 = vmax.f32 %v2168, 0.0
    %v2185 = vmax.f32 %v2169, 0.0
    %v2186 = vmax.f32 %v2170, 0.0
    %v2187 = vmax.f32 %v2171, 0.0
    %v2188 = vmax.f32 %v2172, 0.0
    %v2189 = vmax.f32 %v2173, 0.0
    %2206 = vrot.lane.b32.xlu0 %v2174, 48
    %v2207 = vpop.permute.xlu0 %2206
    %2208 = vrot.lane.b32.xlu0 %v2175, 48
    %v2209 = vpop.permute.xlu0 %2208
    %2210 = vrot.lane.b32.xlu0 %v2176, 48
    %v2211 = vpop.permute.xlu0 %2210
    %2212 = vrot.lane.b32.xlu0 %v2177, 48
    %v2213 = vpop.permute.xlu0 %2212
    %2214 = vrot.lane.b32.xlu0 %v2178, 48
    %v2215 = vpop.permute.xlu0 %2214
    %2216 = vrot.lane.b32.xlu0 %v2179, 48
    %v2217 = vpop.permute.xlu0 %2216
    %2218 = vrot.lane.b32.xlu0 %v2180, 48
    %v2219 = vpop.permute.xlu0 %2218
    %2220 = vrot.lane.b32.xlu0 %v2181, 48
    %v2221 = vpop.permute.xlu0 %2220
    %2222 = vrot.lane.b32.xlu0 %v2182, 48
    %v2223 = vpop.permute.xlu0 %2222
    %2224 = vrot.lane.b32.xlu0 %v2183, 48
    %v2225 = vpop.permute.xlu0 %2224
    %2226 = vrot.lane.b32.xlu0 %v2184, 48
    %v2227 = vpop.permute.xlu0 %2226
    %2228 = vrot.lane.b32.xlu0 %v2185, 48
    %v2229 = vpop.permute.xlu0 %2228
    %2230 = vrot.lane.b32.xlu0 %v2186, 48
    %v2231 = vpop.permute.xlu0 %2230
    %2232 = vrot.lane.b32.xlu0 %v2187, 48
    %v2233 = vpop.permute.xlu0 %2232
    %2234 = vrot.lane.b32.xlu0 %v2188, 48
    %v2235 = vpop.permute.xlu0 %2234
    %2236 = vrot.lane.b32.xlu0 %v2189, 48
    %v2237 = vpop.permute.xlu0 %2236
    %vm2238 = vcmask 392192
    %v2239 = vsel %vm2238, %v2207, %v2209
    %v2240 = vsel %vm2238, %v2211, %v2213
    %v2241 = vsel %vm2238, %v2215, %v2217
    %v2242 = vsel %vm2238, %v2219, %v2221
    %v2243 = vsel %vm2238, %v2223, %v2225
    %v2244 = vsel %vm2238, %v2227, %v2229
    %v2245 = vsel %vm2238, %v2231, %v2233
    %v2246 = vsel %vm2238, %v2235, %v2237
    %v2255 = vmax.f32 %v2147, %v2239
    %v2256 = vmax.f32 %v2148, %v2240
    %v2257 = vmax.f32 %v2149, %v2241
    %v2258 = vmax.f32 %v2150, %v2242
    %v2259 = vmax.f32 %v2151, %v2243
    %v2260 = vmax.f32 %v2152, %v2244
    %v2261 = vmax.f32 %v2153, %v2245
    %v2262 = vmax.f32 %v2154, %v2246
    %v2263 = vrot.slane %v2255, 2
    %v2264 = vrot.slane %v2256, 2
    %v2265 = vrot.slane %v2257, 2
    %v2266 = vrot.slane %v2258, 2
    %v2267 = vrot.slane %v2259, 2
    %v2268 = vrot.slane %v2260, 2
    %v2269 = vrot.slane %v2261, 2
    %v2270 = vrot.slane %v2262, 2
    %v2271 = vsel %vm496, %v2269, %v2270
    %v2272 = vsel %vm496, %v2268, %v2269
    %v2273 = vsel %vm496, %v2267, %v2268
    %v2274 = vsel %vm496, %v2265, %v2266
    %v2275 = vsel %vm496, %v2264, %v2265
    %v2276 = vsel %vm496, %v2263, %v2264
    %v2277 = vmax.f32 %v2255, %v2276
    %v2278 = vmax.f32 %v2256, %v2275
    %v2279 = vmax.f32 %v2257, %v2274
    %v2280 = vmax.f32 %v2259, %v2273
    %v2281 = vmax.f32 %v2260, %v2272
    %v2282 = vmax.f32 %v2261, %v2271
    %v2285 = vrot.slane %v2280, 7
    %vm2286 = vcmask 1041409
    %v2287 = vsel %vm2286, %v2285, %v2277
    %v2289 = vrot.slane %v2277, 4
    %v2290 = vrot.slane %v2280, 3
    %v2291 = vsel %vm2286, %v2290, %v2289
    %2292 = vrot.lane.b32.xlu0 %v2291, 80
    %v2293 = vpop.permute.xlu0 %2292
    %v2297 = vrot.slane %v2281, 7
    %v2298 = vsel %vm2286, %v2297, %v2278
    %2299 = vrot.lane.b32.xlu0 %v2298, 32
    %v2300 = vpop.permute.xlu0 %2299
    %v2302 = vrot.slane %v2278, 4
    %v2303 = vrot.slane %v2281, 3
    %v2304 = vsel %vm2286, %v2303, %v2302
    %2305 = vrot.lane.b32.xlu0 %v2304, 112
    %v2306 = vpop.permute.xlu0 %2305
    %v2310 = vrot.slane %v2282, 7
    %v2311 = vsel %vm2286, %v2310, %v2279
    %2312 = vrot.lane.b32.xlu0 %v2311, 64
    %v2313 = vpop.permute.xlu0 %2312
    %vm2315 = vcmask 654336
    %v2316 = vsel %vm2315, %v2287, %v2293
    %v2317 = vsel %vm127, %v2293, %v2300
    %vm2318 = vcmask 916480
    %v2319 = vsel %vm2318, %v2317, %v2306
    %v2320 = vsel %vm136, %v2306, %v2313
    %v2321 = vld [vmem:[%s5] sm:$0xff]
    %v2322 = vld [vmem:[%s5 + $0x8] sm:$0xff]
    %v2323 = vld [vmem:[%s5 + $0x10] sm:$0xff]
    %v2324 = vld [vmem:[%s5 + $0x18] sm:$0xff]
    %v2325 = vld [vmem:[%s5 + $0x20] sm:$0xff]
    %v2326 = vld [vmem:[%s5 + $0x28] sm:$0xff]
    %v2327 = vld [vmem:[%s5 + $0x30] sm:$0xff]
    %v2328 = vld [vmem:[%s5 + $0x38] sm:$0xff]
    %v2329 = vld [vmem:[%s5 + $0x40] sm:$0xff]
    %v2330 = vld [vmem:[%s5 + $0x48] sm:$0xff]
    %v2331 = vld [vmem:[%s5 + $0x50] sm:$0xff]
    %v2332 = vld [vmem:[%s5 + $0x58] sm:$0xff]
    %v2333 = vld [vmem:[%s5 + $0x60] sm:$0xff]
    %v2334 = vld [vmem:[%s5 + $0x68] sm:$0xff]
    %v2335 = vld [vmem:[%s5 + $0x70] sm:$0xff]
    %v2336 = vld [vmem:[%s5 + $0x78] sm:$0xff]
    %v2337 = vld [vmem:[%s5 + $0x80] sm:$0xff]
    %v2338 = vld [vmem:[%s5 + $0x88] sm:$0xff]
    %v2339 = vld [vmem:[%s5 + $0x90] sm:$0xff]
    %v2340 = vld [vmem:[%s5 + $0x98] sm:$0xff]
    %v2341 = vld [vmem:[%s5 + $0xa0] sm:$0xff]
    %v2342 = vld [vmem:[%s5 + $0xa8] sm:$0xff]
    %v2343 = vld [vmem:[%s5 + $0xb0] sm:$0xff]
    %v2344 = vld [vmem:[%s5 + $0xb8] sm:$0xff]
    %v2345 = vld [vmem:[%s5 + $0xc0] sm:$0xff]
    %v2346 = vld [vmem:[%s5 + $0xc8] sm:$0xff]
    %v2347 = vld [vmem:[%s5 + $0xd0] sm:$0xff]
    %v2348 = vld [vmem:[%s5 + $0xd8] sm:$0xff]
    %v2349 = vld [vmem:[%s5 + $0xe0] sm:$0xff]
    %v2350 = vld [vmem:[%s5 + $0xe8] sm:$0xff]
    %v2351 = vld [vmem:[%s5 + $0xf0] sm:$0xff]
    %v2352 = vld [vmem:[%s5 + $0xf8] sm:$0xff]
    %v2353 = vld [vmem:[%s5 + $0x100] sm:$0xff]
    %v2354 = vld [vmem:[%s5 + $0x108] sm:$0xff]
    %v2355 = vld [vmem:[%s5 + $0x110] sm:$0xff]
    %v2356 = vld [vmem:[%s5 + $0x118] sm:$0xff]
    %v2357 = vld [vmem:[%s5 + $0x120] sm:$0xff]
    %v2358 = vld [vmem:[%s5 + $0x128] sm:$0xff]
    %v2359 = vld [vmem:[%s5 + $0x130] sm:$0xff]
    %v2360 = vld [vmem:[%s5 + $0x138] sm:$0xff]
    %v2361 = vld [vmem:[%s5 + $0x140] sm:$0xff]
    %v2362 = vld [vmem:[%s5 + $0x148] sm:$0xff]
    %v2363 = vld [vmem:[%s5 + $0x150] sm:$0xff]
    %v2364 = vld [vmem:[%s5 + $0x158] sm:$0xff]
    %v2365 = vld [vmem:[%s5 + $0x160] sm:$0xff]
    %v2366 = vld [vmem:[%s5 + $0x168] sm:$0xff]
    %v2367 = vld [vmem:[%s5 + $0x170] sm:$0xff]
    %v2368 = vld [vmem:[%s5 + $0x178] sm:$0xff]
    %v2369 = vld [vmem:[%s5 + $0x180] sm:$0xff]
    %v2370 = vld [vmem:[%s5 + $0x188] sm:$0xff]
    %v2371 = vld [vmem:[%s6] sm:$0x1]
    %v2373 = vlaneseq
    %v2374 = vshrl.u32 %v2373, 7
    %v2375 = vsub.s32 0, %v2374
    %v2376 = vrot.slane %v2371, %v2375
    %vm2378 = vcmask 130048
    %v2379 = vsel %vm2378, %v2313, 0
    %2381 = vmatprep.subr.mxu0 0.0
    %2382 = vmatpush1.msra.mxu0 %v2321
    %2383 = vmatprep.subr.mxu0 0.0
    %2384 = vmatpush1.msra.mxu0 %v2322
    %2385 = vmatprep.subr.mxu0 0.0
    %2386 = vmatpush1.msra.mxu0 %v2323
    %2387 = vmatprep.subr.mxu0 0.0
    %2388 = vmatpush1.msra.mxu0 %v2324
    %2389 = vmatprep.subr.mxu0 0.0
    %2390 = vmatpush1.msra.mxu0 %v2325
    %2391 = vmatprep.subr.mxu0 0.0
    %2392 = vmatpush1.msra.mxu0 %v2326
    %2393 = vmatprep.subr.mxu0 0.0
    %2394 = vmatpush1.msra.mxu0 %v2327
    %2395 = vmatprep.subr.mxu0 0.0
    %2396 = vmatpush1.msra.mxu0 %v2328
    %2397 = vmatprep.subr.mxu0 0.0
    %2398 = vmatpush1.msra.mxu0 %v2329
    %2399 = vmatprep.subr.mxu0 0.0
    %2400 = vmatpush1.msra.mxu0 %v2330
    %2401 = vmatprep.subr.mxu0 0.0
    %2402 = vmatpush1.msra.mxu0 %v2331
    %2403 = vmatprep.subr.mxu0 0.0
    %2404 = vmatpush1.msra.mxu0 %v2332
    %2405 = vmatprep.subr.mxu0 0.0
    %2406 = vmatpush1.msra.mxu0 %v2333
    %2407 = vmatprep.subr.mxu0 0.0
    %2408 = vmatpush1.msra.mxu0 %v2334
    %2409 = vmatprep.subr.mxu0 0.0
    %2410 = vmatpush1.msra.mxu0 %v2335
    %2411 = vmatprep.subr.mxu0 0.0
    %2412 = vmatpush1.msra.mxu0 %v2336
    %2413 = vmatprep.subr.mxu0 0.0
    %2414 = vmatpush1.msra.mxu0 %v2337
    %2415 = vmatprep.subr.mxu0 0.0
    %2416 = vmatpush1.msra.mxu0 %v2338
    %2417 = vmatprep.subr.mxu0 0.0
    %2418 = vmatpush1.msra.mxu0 %v2339
    %2419 = vmatprep.subr.mxu0 0.0
    %2420 = vmatpush1.msra.mxu0 %v2340
    %2421 = vmatprep.subr.mxu0 0.0
    %2422 = vmatpush1.msra.mxu0 %v2341
    %2423 = vmatprep.subr.mxu0 0.0
    %2424 = vmatpush1.msra.mxu0 %v2342
    %2425 = vmatprep.subr.mxu0 0.0
    %2426 = vmatpush1.msra.mxu0 %v2343
    %2427 = vmatprep.subr.mxu0 0.0
    %2428 = vmatpush1.msra.mxu0 %v2344
    %2429 = vmatprep.subr.mxu0 0.0
    %2430 = vmatpush1.msra.mxu0 %v2345
    %2431 = vmatprep.subr.mxu0 0.0
    %2432 = vmatpush1.msra.mxu0 %v2346
    %2433 = vmatprep.subr.mxu0 0.0
    %2434 = vmatpush1.msra.mxu0 %v2347
    %2435 = vmatprep.subr.mxu0 0.0
    %2436 = vmatpush1.msra.mxu0 %v2348
    %2437 = vmatprep.subr.mxu0 0.0
    %2438 = vmatpush1.msra.mxu0 %v2349
    %2439 = vmatprep.subr.mxu0 0.0
    %2440 = vmatpush1.msra.mxu0 %v2350
    %2441 = vmatprep.subr.mxu0 0.0
    %2442 = vmatpush1.msra.mxu0 %v2351
    %2443 = vmatprep.subr.mxu0 0.0
    %2444 = vmatpush1.msra.mxu0 %v2352
    %2445 = vmatprep.mubr.f32.mxu0 %v2319
    %2446 = vmatmul.mubr.f32.gmra.mrb[0].mxu0 %v2316
    %v2447 = vpop.f32.mrb[0].mxu0
    %v2448 = vadd.f32 %v2376, %v2447
    %v2449 = vpop.f32.mrb[0].mxu0
    %2450 = vdwg.mxu0
    %2451 = vmatprep.subr.mxu0 0.0
    %2452 = vmatpush1.msra.mxu0 %v2353
    %2453 = vmatprep.subr.mxu0 0.0
    %2454 = vmatpush1.msra.mxu0 %v2354
    %2455 = vmatprep.subr.mxu0 0.0
    %2456 = vmatpush1.msra.mxu0 %v2355
    %2457 = vmatprep.subr.mxu0 0.0
    %2458 = vmatpush1.msra.mxu0 %v2356
    %2459 = vmatprep.subr.mxu0 0.0
    %2460 = vmatpush1.msra.mxu0 %v2357
    %2461 = vmatprep.subr.mxu0 0.0
    %2462 = vmatpush1.msra.mxu0 %v2358
    %2463 = vmatprep.subr.mxu0 0.0
    %2464 = vmatpush1.msra.mxu0 %v2359
    %2465 = vmatprep.subr.mxu0 0.0
    %2466 = vmatpush1.msra.mxu0 %v2360
    %2467 = vmatprep.subr.mxu0 0.0
    %2468 = vmatpush1.msra.mxu0 %v2361
    %2469 = vmatprep.subr.mxu0 0.0
    %2470 = vmatpush1.msra.mxu0 %v2362
    %2471 = vmatprep.subr.mxu0 0.0
    %2472 = vmatpush1.msra.mxu0 %v2363
    %2473 = vmatprep.subr.mxu0 0.0
    %2474 = vmatpush1.msra.mxu0 %v2364
    %2475 = vmatprep.subr.mxu0 0.0
    %2476 = vmatpush1.msra.mxu0 %v2365
    %2477 = vmatprep.subr.mxu0 0.0
    %2478 = vmatpush1.msra.mxu0 %v2366
    %2479 = vmatprep.subr.mxu0 0.0
    %2480 = vmatpush1.msra.mxu0 %v2367
    %2481 = vmatprep.subr.mxu0 0.0
    %2482 = vmatpush1.msra.mxu0 %v2368
    %2483 = vmatprep.subr.mxu0 0.0
    %2484 = vmatpush1.msra.mxu0 %v2369
    %2485 = vmatprep.subr.mxu0 0.0
    %2486 = vmatpush1.msra.mxu0 %v2370
    %2487 = vmatprep.subr.mxu0 0.0
    %2488 = vmatpush1.msra.mxu0 0.0
    %2489 = vmatprep.subr.mxu0 0.0
    %2490 = vmatpush1.msra.mxu0 0.0
    %2491 = vmatprep.subr.mxu0 0.0
    %2492 = vmatpush1.msra.mxu0 0.0
    %2493 = vmatprep.subr.mxu0 0.0
    %2494 = vmatpush1.msra.mxu0 0.0
    %2495 = vmatprep.subr.mxu0 0.0
    %2496 = vmatpush1.msra.mxu0 0.0
    %2497 = vmatprep.subr.mxu0 0.0
    %2498 = vmatpush1.msra.mxu0 0.0
    %2499 = vmatprep.subr.mxu0 0.0
    %2500 = vmatpush1.msra.mxu0 0.0
    %2501 = vmatprep.subr.mxu0 0.0
    %2502 = vmatpush1.msra.mxu0 0.0
    %2503 = vmatprep.subr.mxu0 0.0
    %2504 = vmatpush1.msra.mxu0 0.0
    %2505 = vmatprep.subr.mxu0 0.0
    %2506 = vmatpush1.msra.mxu0 0.0
    %2507 = vmatprep.subr.mxu0 0.0
    %2508 = vmatpush1.msra.mxu0 0.0
    %2509 = vmatprep.subr.mxu0 0.0
    %2510 = vmatpush1.msra.mxu0 0.0
    %2511 = vmatprep.subr.mxu0 0.0
    %2512 = vmatpush1.msra.mxu0 0.0
    %2513 = vmatprep.subr.mxu0 0.0
    %2514 = vmatpush1.msra.mxu0 0.0
    %2515 = vmatprep.mubr.f32.mxu0 %v2379
    %2516 = vmatmul.mubr.f32.gmra.mrb[0].mxu0 %v2320
    %v2517 = vpop.f32.mrb[0].mxu0
    %v2518 = vadd.f32 %v2448, %v2517
    %v2519 = vpop.f32.mrb[0].mxu0
    %2520 = vdwg.mxu0
    %v2521 = vmax.f32 %v2518, 0.0
    %v2522 = vld [vmem:[%s7] sm:$0xff]
    %v2523 = vld [vmem:[%s7 + $0x8] sm:$0xff]
    %v2524 = vld [vmem:[%s7 + $0x10] sm:$0xff]
    %v2525 = vld [vmem:[%s7 + $0x18] sm:$0xff]
    %v2526 = vld [vmem:[%s7 + $0x20] sm:$0xff]
    %v2527 = vld [vmem:[%s7 + $0x28] sm:$0xff]
    %v2528 = vld [vmem:[%s7 + $0x30] sm:$0xff]
    %v2529 = vld [vmem:[%s7 + $0x38] sm:$0xff]
    %v2530 = vld [vmem:[%s7 + $0x40] sm:$0xff]
    %v2531 = vld [vmem:[%s7 + $0x48] sm:$0xff]
    %v2532 = vld [vmem:[%s7 + $0x50] sm:$0xff]
    %v2533 = vld [vmem:[%s7 + $0x58] sm:$0xff]
    %v2534 = vld [vmem:[%s7 + $0x60] sm:$0xff]
    %v2535 = vld [vmem:[%s7 + $0x68] sm:$0xff]
    %v2536 = vld [vmem:[%s7 + $0x70] sm:$0xff]
    %v2537 = vld [vmem:[%s8] sm:$0x1]
    %v2539 = vlaneseq
    %v2540 = vshrl.u32 %v2539, 7
    %v2541 = vsub.s32 0, %v2540
    %v2542 = vrot.slane %v2537, %v2541
    %vm2544 = vcmask 982016
    %v2546 = vsel %vm2544, %v2521, 0
    %2548 = vmatprep.subr.mxu0 0.0
    %2549 = vmatpush1.msra.mxu0 %v2522
    %2550 = vmatprep.subr.mxu0 0.0
    %2551 = vmatpush1.msra.mxu0 %v2523
    %2552 = vmatprep.subr.mxu0 0.0
    %2553 = vmatpush1.msra.mxu0 %v2524
    %2554 = vmatprep.subr.mxu0 0.0
    %2555 = vmatpush1.msra.mxu0 %v2525
    %2556 = vmatprep.subr.mxu0 0.0
    %2557 = vmatpush1.msra.mxu0 %v2526
    %2558 = vmatprep.subr.mxu0 0.0
    %2559 = vmatpush1.msra.mxu0 %v2527
    %2560 = vmatprep.subr.mxu0 0.0
    %2561 = vmatpush1.msra.mxu0 %v2528
    %2562 = vmatprep.subr.mxu0 0.0
    %2563 = vmatpush1.msra.mxu0 %v2529
    %2564 = vmatprep.subr.mxu0 0.0
    %2565 = vmatpush1.msra.mxu0 %v2530
    %2566 = vmatprep.subr.mxu0 0.0
    %2567 = vmatpush1.msra.mxu0 %v2531
    %2568 = vmatprep.subr.mxu0 0.0
    %2569 = vmatpush1.msra.mxu0 %v2532
    %2570 = vmatprep.subr.mxu0 0.0
    %2571 = vmatpush1.msra.mxu0 %v2533
    %2572 = vmatprep.subr.mxu0 0.0
    %2573 = vmatpush1.msra.mxu0 %v2534
    %2574 = vmatprep.subr.mxu0 0.0
    %2575 = vmatpush1.msra.mxu0 %v2535
    %2576 = vmatprep.subr.mxu0 0.0
    %2577 = vmatpush1.msra.mxu0 %v2536
    %2578 = vmatprep.subr.mxu0 0.0
    %2579 = vmatpush1.msra.mxu0 0.0
    %2580 = vmatprep.subr.mxu0 0.0
    %2581 = vmatpush1.msra.mxu0 0.0
    %2582 = vmatprep.subr.mxu0 0.0
    %2583 = vmatpush1.msra.mxu0 0.0
    %2584 = vmatprep.subr.mxu0 0.0
    %2585 = vmatpush1.msra.mxu0 0.0
    %2586 = vmatprep.subr.mxu0 0.0
    %2587 = vmatpush1.msra.mxu0 0.0
    %2588 = vmatprep.subr.mxu0 0.0
    %2589 = vmatpush1.msra.mxu0 0.0
    %2590 = vmatprep.subr.mxu0 0.0
    %2591 = vmatpush1.msra.mxu0 0.0
    %2592 = vmatprep.subr.mxu0 0.0
    %2593 = vmatpush1.msra.mxu0 0.0
    %2594 = vmatprep.subr.mxu0 0.0
    %2595 = vmatpush1.msra.mxu0 0.0
    %2596 = vmatprep.subr.mxu0 0.0
    %2597 = vmatpush1.msra.mxu0 0.0
    %2598 = vmatprep.subr.mxu0 0.0
    %2599 = vmatpush1.msra.mxu0 0.0
    %2600 = vmatprep.subr.mxu0 0.0
    %2601 = vmatpush1.msra.mxu0 0.0
    %2602 = vmatprep.subr.mxu0 0.0
    %2603 = vmatpush1.msra.mxu0 0.0
    %2604 = vmatprep.subr.mxu0 0.0
    %2605 = vmatpush1.msra.mxu0 0.0
    %2606 = vmatprep.subr.mxu0 0.0
    %2607 = vmatpush1.msra.mxu0 0.0
    %2608 = vmatprep.subr.mxu0 0.0
    %2609 = vmatpush1.msra.mxu0 0.0
    %2610 = vmatprep.subr.mxu0 0.0
    %2611 = vmatpush1.msra.mxu0 0.0
    %2612 = vmatprep.mubr.f32.mxu0 0.0
    %2613 = vmatmul.mubr.f32.gmra.mrb[0].mxu0 %v2546
    %v2614 = vpop.f32.mrb[0].mxu0
    %v2615 = vadd.f32 %v2542, %v2614
    %v2616 = vpop.f32.mrb[0].mxu0
    %2617 = vdwg.mxu0
    %v2618 = vmax.f32 %v2615, 0.0
    %v2619 = vld [vmem:[%s9] sm:$0xff]
    %v2620 = vld [vmem:[%s9 + $0x8] sm:$0xff]
    %v2621 = vld [vmem:[%s9 + $0x10] sm:$0xff]
    %v2622 = vld [vmem:[%s9 + $0x18] sm:$0xff]
    %v2623 = vld [vmem:[%s9 + $0x20] sm:$0xff]
    %v2624 = vld [vmem:[%s9 + $0x28] sm:$0xff]
    %v2625 = vld [vmem:[%s9 + $0x30] sm:$0xff]
    %v2626 = vld [vmem:[%s9 + $0x38] sm:$0xff]
    %v2627 = vld [vmem:[%s9 + $0x40] sm:$0xff]
    %v2628 = vld [vmem:[%s9 + $0x48] sm:$0xff]
    %v2629 = vld [vmem:[%s9 + $0x50] sm:$0xf]
    %v2630 = vld [vmem:[%s10] sm:$0x1]
    %v2632 = vlaneseq
    %v2633 = vshrl.u32 %v2632, 7
    %v2634 = vsub.s32 0, %v2633
    %v2635 = vrot.slane %v2630, %v2634
    %v2638 = vsel %vm1289, %v2618, 0
    %v2641 = vsel %vm1314, %v2629, 0
    %2643 = vmatprep.subr.mxu0 0.0
    %2644 = vmatpush1.msra.mxu0 %v2619
    %2645 = vmatprep.subr.mxu0 0.0
    %2646 = vmatpush1.msra.mxu0 %v2620
    %2647 = vmatprep.subr.mxu0 0.0
    %2648 = vmatpush1.msra.mxu0 %v2621
    %2649 = vmatprep.subr.mxu0 0.0
    %2650 = vmatpush1.msra.mxu0 %v2622
    %2651 = vmatprep.subr.mxu0 0.0
    %2652 = vmatpush1.msra.mxu0 %v2623
    %2653 = vmatprep.subr.mxu0 0.0
    %2654 = vmatpush1.msra.mxu0 %v2624
    %2655 = vmatprep.subr.mxu0 0.0
    %2656 = vmatpush1.msra.mxu0 %v2625
    %2657 = vmatprep.subr.mxu0 0.0
    %2658 = vmatpush1.msra.mxu0 %v2626
    %2659 = vmatprep.subr.mxu0 0.0
    %2660 = vmatpush1.msra.mxu0 %v2627
    %2661 = vmatprep.subr.mxu0 0.0
    %2662 = vmatpush1.msra.mxu0 %v2628
    %2663 = vmatprep.subr.mxu0 0.0
    %2664 = vmatpush1.msra.mxu0 %v2641
    %2665 = vmatprep.subr.mxu0 0.0
    %2666 = vmatpush1.msra.mxu0 0.0
    %2667 = vmatprep.subr.mxu0 0.0
    %2668 = vmatpush1.msra.mxu0 0.0
    %2669 = vmatprep.subr.mxu0 0.0
    %2670 = vmatpush1.msra.mxu0 0.0
    %2671 = vmatprep.subr.mxu0 0.0
    %2672 = vmatpush1.msra.mxu0 0.0
    %2673 = vmatprep.subr.mxu0 0.0
    %2674 = vmatpush1.msra.mxu0 0.0
    %2675 = vmatprep.subr.mxu0 0.0
    %2676 = vmatpush1.msra.mxu0 0.0
    %2677 = vmatprep.subr.mxu0 0.0
    %2678 = vmatpush1.msra.mxu0 0.0
    %2679 = vmatprep.subr.mxu0 0.0
    %2680 = vmatpush1.msra.mxu0 0.0
    %2681 = vmatprep.subr.mxu0 0.0
    %2682 = vmatpush1.msra.mxu0 0.0
    %2683 = vmatprep.subr.mxu0 0.0
    %2684 = vmatpush1.msra.mxu0 0.0
    %2685 = vmatprep.subr.mxu0 0.0
    %2686 = vmatpush1.msra.mxu0 0.0
    %2687 = vmatprep.subr.mxu0 0.0
    %2688 = vmatpush1.msra.mxu0 0.0
    %2689 = vmatprep.subr.mxu0 0.0
    %2690 = vmatpush1.msra.mxu0 0.0
    %2691 = vmatprep.subr.mxu0 0.0
    %2692 = vmatpush1.msra.mxu0 0.0
    %2693 = vmatprep.subr.mxu0 0.0
    %2694 = vmatpush1.msra.mxu0 0.0
    %2695 = vmatprep.subr.mxu0 0.0
    %2696 = vmatpush1.msra.mxu0 0.0
    %2697 = vmatprep.subr.mxu0 0.0
    %2698 = vmatpush1.msra.mxu0 0.0
    %2699 = vmatprep.subr.mxu0 0.0
    %2700 = vmatpush1.msra.mxu0 0.0
    %2701 = vmatprep.subr.mxu0 0.0
    %2702 = vmatpush1.msra.mxu0 0.0
    %2703 = vmatprep.subr.mxu0 0.0
    %2704 = vmatpush1.msra.mxu0 0.0
    %2705 = vmatprep.subr.mxu0 0.0
    %2706 = vmatpush1.msra.mxu0 0.0
    %2707 = vmatprep.mubr.f32.mxu0 0.0
    %2708 = vmatmul.mubr.f32.gmra.mrb[0].mxu0 %v2638
    %v2709 = vpop.f32.mrb[0].mxu0
    %v2710 = vadd.f32 %v2635, %v2709
    %v2711 = vpop.f32.mrb[0].mxu0
    %2712 = vdwg.mxu0
    %2713 = vst [vmem:[#allocation2] sm:$0x3] %v2710
    // Predicated region
    $region46: #{net_forward.1} parent=1 // pred_check
      _
    $region47: #{net_forward.1} parent=1 // pred_check_branch
      %2715 = sbr.rel (0) target = $region49
    $region48: #{net_forward.1} parent=1 // pred_region
      %s2717 = ssub.s32 32, 32
      %2718 = vsyncadd [#allocation3], %s2717
      %s2720 = sshll.u32 [#allocation2], 4
      %s2721 = int_to_ptr.vmem [resolvable:$true] %s2720
      %2723 = dma.vmem_to_hbm [thread:$0]  %s2721, 32, %s11, [#allocation3]
    $region49: #{net_forward.1} parent=1 // pred_fallthru
      _
    // Predicated region
    $region50: #{net_forward.1} parent=1 // pred_check
      _
    $region51: #{net_forward.1} parent=1 // pred_check_branch
      %2725 = sbr.rel (0) target = $region53
    $region52: #{net_forward.1} parent=1 // pred_region
      %2726 = dma.done [#allocation3], 32
    $region53: #{net_forward.1} parent=1 // pred_fallthru
      _
    %2727 = vsyncpa [#allocation3], 1

</llo_original>
